<compile_context>
chip_gen: v7x
topology: tpu7x:2x2x1
jax: 0.10.0
libtpu: 0.0.40
codegen_flags: <defaults>
</compile_context>

<pallas_src>
import functools

import jax
import jax.numpy as jnp
import numpy as np
from jax import lax
from jax.experimental import pallas as pl
from jax.experimental.pallas import tpu as pltpu

NUM_LAYERS = 12
BOS_ID = 1


def _prepare_weights(params):
    """Fuse per-layer W_ih/W_hh, fold biases in as an extra K row, cast to bf16."""
    embed, w_ih0_t, w_hh0_t, w_ih_t, w_hh_t, b, w_out_t, b_out = params
    # gates = [x, h, 1] @ [[W_ih],[W_hh],[b]]  -> bias comes out of the MXU
    # accumulation for free (no per-layer broadcast + VPU add on the serial path).
    w0 = jnp.concatenate([w_ih0_t, w_hh0_t, b[0:1, :]], axis=0)          # (E+H+1, 4H)
    w_rest = jnp.concatenate([w_ih_t, w_hh_t, b[1:, None, :]], axis=1)   # (L-1, 2H+1, 4H)
    w_out = jnp.concatenate([w_out_t, b_out], axis=0)                    # (H+1, V)
    return (embed.astype(jnp.bfloat16), w0.astype(jnp.bfloat16),
            w_rest.astype(jnp.bfloat16), w_out.astype(jnp.bfloat16))


def make_decoder_kernel(B_TILE, E, H, V, T, bos_id):
    def kernel(h0_ref, c0_ref, embed_ref, w0_ref, w_ref, w_out_ref,
               out_ref, lbuf, sem):
        # Batch-tile offset of this grid step ("parallel" axis -> v7x megacore).
        b_off = pl.multiple_of(pl.program_id(0) * B_TILE, B_TILE)

        iota_v = lax.broadcasted_iota(jnp.int32, (B_TILE, V), 1)
        ones_col = jnp.ones((B_TILE, 1), jnp.bfloat16)   # hoisted, reused every layer

        # states = (h0.repeat(12,1,1), c0.repeat(12,1,1)); first token = '[BOS]'.
        # h is only ever consumed as a bf16 MXU operand -> carry it in bf16.
        h_init = (h0_ref[...].astype(jnp.bfloat16),) * NUM_LAYERS
        c_init = (c0_ref[...],) * NUM_LAYERS
        onehot0 = (iota_v == bos_id).astype(jnp.bfloat16)

        def step(t, carry):
            onehot, h, c = carry
            slot = t & 1

            # Embedding lookup as a one-hot matmul on the MXU (dropout = identity).
            # TODO(synk): switch to an SMEM-token row gather for large vocab.
            x = jnp.dot(onehot, embed_ref[...],
                        preferred_element_type=jnp.float32).astype(jnp.bfloat16)

            # 12-layer LSTM step; PyTorch gate order i, f, g, o; bias folded in.
            new_h, new_c = [], []
            for l in range(NUM_LAYERS):
                w = w0_ref[...] if l == 0 else w_ref[l - 1]
                zcat = jnp.concatenate([x, h[l], ones_col], axis=-1)     # (B, K+1) bf16
                gates = jnp.dot(zcat, w, preferred_element_type=jnp.float32)  # (B, 4H)

                sig = jax.nn.sigmoid(gates)          # i/f/o in one whole-vreg EUP pass
                i_g = sig[:, 0:H]
                f_g = sig[:, H:2 * H]
                o_g = sig[:, 3 * H:4 * H]
                g_g = jnp.tanh(gates[:, 2 * H:3 * H])

                c_new = f_g * c[l] + i_g * g_g
                h_new = (o_g * jnp.tanh(c_new)).astype(jnp.bfloat16)
                new_h.append(h_new)
                new_c.append(c_new)
                x = h_new

            # Output projection (nn.Linear) with folded bias -> (B, V) f32 logits.
            logits = jnp.dot(jnp.concatenate([x, ones_col], axis=-1), w_out_ref[...],
                             preferred_element_type=jnp.float32)

            # Double-buffered HBM writeback (off the recurrence's critical path):
            # wait for this slot's previous DMA (issued at step t-2), refill, send.
            @pl.when(t >= 2)
            def _():
                pltpu.make_async_copy(
                    lbuf.at[slot],
                    out_ref.at[pl.ds(b_off, B_TILE), pl.ds(0, 1), :],
                    sem.at[slot]).wait()

            lbuf[slot] = logits[:, None, :]
            pltpu.make_async_copy(
                lbuf.at[slot],
                out_ref.at[pl.ds(b_off, B_TILE), pl.ds(t, 1), :],
                sem.at[slot]).start()

            # Greedy next token: argmax over vocab (lowest index on ties, matching
            # jnp.argmax) -> one-hot for the next step's embedding matmul.
            # (Exact two-pass reduction kept; packed single-pass argmax would be
            #  lossy in the logit mantissa and only matters at large V.)
            m = jnp.max(logits, axis=-1, keepdims=True)
            first_idx = jnp.min(jnp.where(logits == m, iota_v, V),
                                axis=-1, keepdims=True)
            onehot_next = (iota_v == first_idx).astype(jnp.bfloat16)
            return onehot_next, tuple(new_h), tuple(new_c)

        lax.fori_loop(0, T, step, (onehot0, h_init, c_init))

        # Drain the (at most two) outstanding writeback DMAs before kernel exit.
        drain_slots = (0,) if T == 1 else (0, 1)
        for s in drain_slots:
            pltpu.make_async_copy(
                lbuf.at[s],
                out_ref.at[pl.ds(b_off, B_TILE), pl.ds(0, 1), :],
                sem.at[s]).wait()

    return kernel


def decoder_forward(h0, c0, params, *, max_len, bos_id=BOS_ID):
    B, H = h0.shape
    V, E = params[0].shape
    T = int(max_len)

    embed_bf, w0_aug, w_rest_aug, w_out_aug = _prepare_weights(params)

    # Pad batch to a full sublane tile and split into independent batch tiles:
    # every matmul's M equals B_TILE (stack more decode streams along batch to
    # raise MXU row utilization), and the batch-tile grid axis is "parallel" so
    # v7x's two TensorCores each take a slice of the streams.
    B_pad = max(8, -(-B // 8) * 8)
    B_TILE = min(B_pad, 256)
    B_pad = -(-B_pad // B_TILE) * B_TILE
    num_btiles = B_pad // B_TILE
    pad = B_pad - B
    h0_p = jnp.pad(h0, ((0, pad), (0, 0)))
    c0_p = jnp.pad(c0, ((0, pad), (0, 0)))

    kernel = make_decoder_kernel(B_TILE, E, H, V, T, bos_id)

    out = pl.pallas_call(
        kernel,
        out_shape=jax.ShapeDtypeStruct((B_pad, T, V), jnp.float32),
        grid=(num_btiles,),
        in_specs=[
            pl.BlockSpec((B_TILE, H), lambda b: (b, 0)),                      # h0
            pl.BlockSpec((B_TILE, H), lambda b: (b, 0)),                      # c0
            pl.BlockSpec((V, E), lambda b: (0, 0)),                           # embedding
            pl.BlockSpec((E + H + 1, 4 * H), lambda b: (0, 0)),               # layer-0 W
            pl.BlockSpec((NUM_LAYERS - 1, 2 * H + 1, 4 * H),
                         lambda b: (0, 0, 0)),                                # layers 1..11 W
            pl.BlockSpec((H + 1, V), lambda b: (0, 0)),                       # output W
        ],
        out_specs=pl.BlockSpec(memory_space=pl.ANY),   # HBM; written via per-step DMA
        scratch_shapes=[
            pltpu.VMEM((2, B_TILE, 1, V), jnp.float32),   # double-buffered logits slab
            pltpu.SemaphoreType.DMA((2,)),
        ],
        compiler_params=pltpu.CompilerParams(
            dimension_semantics=("parallel",),
            vmem_limit_bytes=32 * 1024 * 1024,
        ),
    )(h0_p, c0_p, embed_bf, w0_aug, w_rest_aug, w_out_aug)

    # Batch-major (B, T, V) is emitted directly by the kernel's DMA; just drop
    # padded rows (no extra HBM transpose pass).
    return out[:B]


def init_params(key, V, E, H, L):
    ks = jax.random.split(key, 8)
    s = 1.0 / float(np.sqrt(H))
    embed = jax.random.normal(ks[0], (V, E), jnp.float32)
    w_ih0_t = jax.random.uniform(ks[1], (E, 4 * H), jnp.float32, -s, s)
    w_hh0_t = jax.random.uniform(ks[2], (H, 4 * H), jnp.float32, -s, s)
    w_ih_t = jax.random.uniform(ks[3], (L - 1, H, 4 * H), jnp.float32, -s, s)
    w_hh_t = jax.random.uniform(ks[4], (L - 1, H, 4 * H), jnp.float32, -s, s)
    # combined bias per layer (b_ih + b_hh)
    b = jax.random.uniform(ks[5], (L, 4 * H), jnp.float32, -2 * s, 2 * s)
    w_out_t = jax.random.uniform(ks[6], (H, V), jnp.float32, -s, s)
    b_out = jax.random.uniform(ks[7], (1, V), jnp.float32, -s, s)
    return embed, w_ih0_t, w_hh0_t, w_ih_t, w_hh_t, b, w_out_t, b_out


def decoder_ref(h0, c0, params, max_len, bos_id=BOS_ID):
    """Pure-JAX reference of the greedy decode (target_token_ids=None branch).

    Mirrors the kernel's numerics (bf16 weights, fused per-layer dot with folded
    bias, f32 accumulation) so the greedy rollout follows the same token path.
    """
    embed_bf, w0_aug, w_rest_aug, w_out_aug = _prepare_weights(params)
    B, H = h0.shape
    ones_col = jnp.ones((B, 1), jnp.bfloat16)

    h = [h0] * NUM_LAYERS
    c = [c0] * NUM_LAYERS
    tok = jnp.full((B,), bos_id, jnp.int32)
    logits_list = []
    for _ in range(max_len):
        x = embed_bf[tok]                          # embedding lookup, dropout = identity
        new_h, new_c = [], []
        for l in range(NUM_LAYERS):
            w = w0_aug if l == 0 else w_rest_aug[l - 1]
            zcat = jnp.concatenate([x, h[l].astype(jnp.bfloat16), ones_col], axis=-1)
            gates = jnp.dot(zcat, w, preferred_element_type=jnp.float32)
            i_g, f_g, g_g, o_g = jnp.split(gates, 4, axis=-1)
            cn = jax.nn.sigmoid(f_g) * c[l] + jax.nn.sigmoid(i_g) * jnp.tanh(g_g)
            hn = jax.nn.sigmoid(o_g) * jnp.tanh(cn)
            new_h.append(hn)
            new_c.append(cn)
            x = hn.astype(jnp.bfloat16)
        h, c = new_h, new_c
        logits = jnp.dot(jnp.concatenate([x, ones_col], axis=-1), w_out_aug,
                         preferred_element_type=jnp.float32)          # (B, V)
        logits_list.append(logits[:, None, :])
        tok = jnp.argmax(logits, axis=-1).astype(jnp.int32)
    return jnp.concatenate(logits_list, axis=1)


if __name__ == "__main__":
    B, E, H, V = 2, 16, 32, 128   # batch, embed_size, hidden_size, vocab_size
    T = 8                          # max_len (decode steps)

    key = jax.random.PRNGKey(0)
    kp, kh, kc = jax.random.split(key, 3)
    params = init_params(kp, V, E, H, NUM_LAYERS)
    h0 = jax.random.normal(kh, (B, H), jnp.float32)   # states[0]: (batch, hidden)
    c0 = jax.random.normal(kc, (B, H), jnp.float32)   # states[1]: (batch, hidden)

    run = jax.jit(functools.partial(decoder_forward, max_len=T))
    out = jax.block_until_ready(run(h0, c0, params))

    assert out.shape == (B, T, V), out.shape
    assert bool(jnp.all(jnp.isfinite(out)))

    ref = decoder_ref(h0, c0, params, T)
    # Step-0 logits are a cascade-free check of the LSTM stack + projection.
    np.testing.assert_allclose(np.asarray(out[:, 0, :]),
                               np.asarray(ref[:, 0, :]), rtol=2e-2, atol=2e-2)
    # Full greedy rollout (reference mirrors kernel numerics, so only MXU/XLA
    # accumulation-order differences remain).
    np.testing.assert_allclose(np.asarray(out), np.asarray(ref),
                               rtol=5e-2, atol=5e-2)

    print("KERNEL_OK")
</pallas_src>

<mosaic_0001>
module attributes {stable_mosaic.version = 11 : i64} {
  func.func @kernel(%arg0: i32, %arg1: memref<8x32xf32, #tpu.memory_space<vmem>>, %arg2: memref<8x32xf32, #tpu.memory_space<vmem>>, %arg3: memref<128x16xbf16, #tpu.memory_space<vmem>>, %arg4: memref<49x128xbf16, #tpu.memory_space<vmem>>, %arg5: memref<11x65x128xbf16, #tpu.memory_space<vmem>>, %arg6: memref<33x128xbf16, #tpu.memory_space<vmem>>, %arg7: memref<8x8x128xf32, #tpu.memory_space<any>>, %arg8: memref<2x8x1x128xf32, #tpu.memory_space<vmem>>, %arg9: memref<2x!tpu.dma_semaphore, #tpu.memory_space<semaphore_mem>>) attributes {dimension_semantics = [#tpu.dimension_semantics<parallel>], iteration_bounds = array<i64: 1>, scalar_prefetch = 0 : i64, scratch_operands = 2 : i64, tpu.core_type = #tpu.core_type<tc>, window_params = [{transform_indices = @transform_0, window_bounds = array<i64: 8, 32>}, {transform_indices = @transform_1, window_bounds = array<i64: 8, 32>}, {pipeline_mode = #tpu.pipeline_mode<synchronous>, transform_indices = @transform_2, window_bounds = array<i64: 128, 16>}, {pipeline_mode = #tpu.pipeline_mode<synchronous>, transform_indices = @transform_3, window_bounds = array<i64: 49, 128>}, {pipeline_mode = #tpu.pipeline_mode<synchronous>, transform_indices = @transform_4, window_bounds = array<i64: 11, 65, 128>}, {pipeline_mode = #tpu.pipeline_mode<synchronous>, transform_indices = @transform_5, window_bounds = array<i64: 33, 128>}, {}]} {
    %c8_i32 = arith.constant 8 : i32
    %0 = arith.muli %arg0, %c8_i32 : i32
    %1 = tpu.assume_multiple %0, 8 : i32
    %2 = tpu.iota {dimensions = array<i32: 1>} : vector<8x128xi32>
    %cst = arith.constant 1.000000e+00 : bf16
    %3 = vector.broadcast %cst : bf16 to vector<8x1xbf16>
    %c0 = arith.constant 0 : index
    %c0_0 = arith.constant 0 : index
    %4 = vector.load %arg1[%c0, %c0_0] : memref<8x32xf32, #tpu.memory_space<vmem>>, vector<8x32xf32>
    %5 = arith.truncf %4 : vector<8x32xf32> to vector<8x32xbf16>
    %c0_1 = arith.constant 0 : index
    %c0_2 = arith.constant 0 : index
    %6 = vector.load %arg2[%c0_1, %c0_2] : memref<8x32xf32, #tpu.memory_space<vmem>>, vector<8x32xf32>
    %c1_i32 = arith.constant 1 : i32
    %7 = vector.broadcast %c1_i32 : i32 to vector<8x128xi32>
    %8 = arith.cmpi eq, %2, %7 : vector<8x128xi32>
    %9 = arith.extui %8 : vector<8x128xi1> to vector<8x128xi32>
    %10 = arith.sitofp %9 : vector<8x128xi32> to vector<8x128xf32>
    %11 = arith.truncf %10 : vector<8x128xf32> to vector<8x128xbf16>
    %c0_i32 = arith.constant 0 : i32
    %c8_i32_3 = arith.constant 8 : i32
    %12 = arith.addi %c0_i32, %c8_i32_3 : i32
    %c1_i32_4 = arith.constant 1 : i32
    %13:25 = scf.for %arg10 = %c0_i32 to %12 step %c1_i32_4 iter_args(%arg11 = %11, %arg12 = %5, %arg13 = %5, %arg14 = %5, %arg15 = %5, %arg16 = %5, %arg17 = %5, %arg18 = %5, %arg19 = %5, %arg20 = %5, %arg21 = %5, %arg22 = %5, %arg23 = %5, %arg24 = %6, %arg25 = %6, %arg26 = %6, %arg27 = %6, %arg28 = %6, %arg29 = %6, %arg30 = %6, %arg31 = %6, %arg32 = %6, %arg33 = %6, %arg34 = %6, %arg35 = %6) -> (vector<8x128xbf16>, vector<8x32xbf16>, vector<8x32xbf16>, vector<8x32xbf16>, vector<8x32xbf16>, vector<8x32xbf16>, vector<8x32xbf16>, vector<8x32xbf16>, vector<8x32xbf16>, vector<8x32xbf16>, vector<8x32xbf16>, vector<8x32xbf16>, vector<8x32xbf16>, vector<8x32xf32>, vector<8x32xf32>, vector<8x32xf32>, vector<8x32xf32>, vector<8x32xf32>, vector<8x32xf32>, vector<8x32xf32>, vector<8x32xf32>, vector<8x32xf32>, vector<8x32xf32>, vector<8x32xf32>, vector<8x32xf32>)  : i32 {
      %c1_i32_20 = arith.constant 1 : i32
      %24 = arith.andi %arg10, %c1_i32_20 : i32
      %c0_21 = arith.constant 0 : index
      %c0_22 = arith.constant 0 : index
      %25 = vector.load %arg3[%c0_21, %c0_22] : memref<128x16xbf16, #tpu.memory_space<vmem>>, vector<128x16xbf16>
      %cst_23 = arith.constant dense<0.000000e+00> : vector<8x16xf32>
      %26 = tpu.matmul %arg11, %25, %cst_23 {dimension_numbers = #tpu.dot_dimension_numbers<[1], [0], [0], [1], [0, 0, 1, 1], [], []>} : vector<8x128xbf16>, vector<128x16xbf16>, vector<8x16xf32> -> vector<8x16xf32>
      %27 = arith.truncf %26 : vector<8x16xf32> to vector<8x16xbf16>
      %c0_24 = arith.constant 0 : index
      %c0_25 = arith.constant 0 : index
      %28 = vector.load %arg4[%c0_24, %c0_25] : memref<49x128xbf16, #tpu.memory_space<vmem>>, vector<49x128xbf16>
      %29 = tpu.concatenate %27, %arg12, %3 in 1 : vector<8x16xbf16>, vector<8x32xbf16>, vector<8x1xbf16> -> vector<8x49xbf16>
      %cst_26 = arith.constant dense<0.000000e+00> : vector<8x128xf32>
      %30 = tpu.matmul %29, %28, %cst_26 {dimension_numbers = #tpu.dot_dimension_numbers<[1], [0], [0], [1], [0, 0, 1, 1], [], []>} : vector<8x49xbf16>, vector<49x128xbf16>, vector<8x128xf32> -> vector<8x128xf32>
      %31 = arith.negf %30 : vector<8x128xf32>
      %32 = math.exp %31 : vector<8x128xf32>
      %cst_27 = arith.constant 1.000000e+00 : f32
      %33 = vector.broadcast %cst_27 : f32 to vector<8x128xf32>
      %34 = arith.addf %33, %32 : vector<8x128xf32>
      %35 = arith.divf %33, %34 : vector<8x128xf32>
      %36 = vector.extract_strided_slice %35 {offsets = [0, 0], sizes = [8, 32], strides = [1, 1]} : vector<8x128xf32> to vector<8x32xf32>
      %37 = vector.extract_strided_slice %35 {offsets = [0, 32], sizes = [8, 32], strides = [1, 1]} : vector<8x128xf32> to vector<8x32xf32>
      %38 = vector.extract_strided_slice %35 {offsets = [0, 96], sizes = [8, 32], strides = [1, 1]} : vector<8x128xf32> to vector<8x32xf32>
      %39 = vector.extract_strided_slice %30 {offsets = [0, 64], sizes = [8, 32], strides = [1, 1]} : vector<8x128xf32> to vector<8x32xf32>
      %40 = math.tanh %39 : vector<8x32xf32>
      %41 = arith.mulf %37, %arg24 : vector<8x32xf32>
      %42 = arith.mulf %36, %40 : vector<8x32xf32>
      %43 = arith.addf %41, %42 : vector<8x32xf32>
      %44 = math.tanh %43 : vector<8x32xf32>
      %45 = arith.mulf %38, %44 : vector<8x32xf32>
      %46 = arith.truncf %45 : vector<8x32xf32> to vector<8x32xbf16>
      %c0_28 = arith.constant 0 : index
      %c0_29 = arith.constant 0 : index
      %c0_30 = arith.constant 0 : index
      %47 = vector.load %arg5[%c0_28, %c0_29, %c0_30] : memref<11x65x128xbf16, #tpu.memory_space<vmem>>, vector<1x65x128xbf16>
      %48 = vector.shape_cast %47 : vector<1x65x128xbf16> to vector<65x128xbf16>
      %49 = tpu.concatenate %46, %arg13, %3 in 1 : vector<8x32xbf16>, vector<8x32xbf16>, vector<8x1xbf16> -> vector<8x65xbf16>
      %cst_31 = arith.constant dense<0.000000e+00> : vector<8x128xf32>
      %50 = tpu.matmul %49, %48, %cst_31 {dimension_numbers = #tpu.dot_dimension_numbers<[1], [0], [0], [1], [0, 0, 1, 1], [], []>} : vector<8x65xbf16>, vector<65x128xbf16>, vector<8x128xf32> -> vector<8x128xf32>
      %51 = arith.negf %50 : vector<8x128xf32>
      %52 = math.exp %51 : vector<8x128xf32>
      %cst_32 = arith.constant 1.000000e+00 : f32
      %53 = vector.broadcast %cst_32 : f32 to vector<8x128xf32>
      %54 = arith.addf %53, %52 : vector<8x128xf32>
      %55 = arith.divf %53, %54 : vector<8x128xf32>
      %56 = vector.extract_strided_slice %55 {offsets = [0, 0], sizes = [8, 32], strides = [1, 1]} : vector<8x128xf32> to vector<8x32xf32>
      %57 = vector.extract_strided_slice %55 {offsets = [0, 32], sizes = [8, 32], strides = [1, 1]} : vector<8x128xf32> to vector<8x32xf32>
      %58 = vector.extract_strided_slice %55 {offsets = [0, 96], sizes = [8, 32], strides = [1, 1]} : vector<8x128xf32> to vector<8x32xf32>
      %59 = vector.extract_strided_slice %50 {offsets = [0, 64], sizes = [8, 32], strides = [1, 1]} : vector<8x128xf32> to vector<8x32xf32>
      %60 = math.tanh %59 : vector<8x32xf32>
      %61 = arith.mulf %57, %arg25 : vector<8x32xf32>
      %62 = arith.mulf %56, %60 : vector<8x32xf32>
      %63 = arith.addf %61, %62 : vector<8x32xf32>
      %64 = math.tanh %63 : vector<8x32xf32>
      %65 = arith.mulf %58, %64 : vector<8x32xf32>
      %66 = arith.truncf %65 : vector<8x32xf32> to vector<8x32xbf16>
      %c1 = arith.constant 1 : index
      %c0_33 = arith.constant 0 : index
      %c0_34 = arith.constant 0 : index
      %67 = vector.load %arg5[%c1, %c0_33, %c0_34] : memref<11x65x128xbf16, #tpu.memory_space<vmem>>, vector<1x65x128xbf16>
      %68 = vector.shape_cast %67 : vector<1x65x128xbf16> to vector<65x128xbf16>
      %69 = tpu.concatenate %66, %arg14, %3 in 1 : vector<8x32xbf16>, vector<8x32xbf16>, vector<8x1xbf16> -> vector<8x65xbf16>
      %cst_35 = arith.constant dense<0.000000e+00> : vector<8x128xf32>
      %70 = tpu.matmul %69, %68, %cst_35 {dimension_numbers = #tpu.dot_dimension_numbers<[1], [0], [0], [1], [0, 0, 1, 1], [], []>} : vector<8x65xbf16>, vector<65x128xbf16>, vector<8x128xf32> -> vector<8x128xf32>
      %71 = arith.negf %70 : vector<8x128xf32>
      %72 = math.exp %71 : vector<8x128xf32>
      %cst_36 = arith.constant 1.000000e+00 : f32
      %73 = vector.broadcast %cst_36 : f32 to vector<8x128xf32>
      %74 = arith.addf %73, %72 : vector<8x128xf32>
      %75 = arith.divf %73, %74 : vector<8x128xf32>
      %76 = vector.extract_strided_slice %75 {offsets = [0, 0], sizes = [8, 32], strides = [1, 1]} : vector<8x128xf32> to vector<8x32xf32>
      %77 = vector.extract_strided_slice %75 {offsets = [0, 32], sizes = [8, 32], strides = [1, 1]} : vector<8x128xf32> to vector<8x32xf32>
      %78 = vector.extract_strided_slice %75 {offsets = [0, 96], sizes = [8, 32], strides = [1, 1]} : vector<8x128xf32> to vector<8x32xf32>
      %79 = vector.extract_strided_slice %70 {offsets = [0, 64], sizes = [8, 32], strides = [1, 1]} : vector<8x128xf32> to vector<8x32xf32>
      %80 = math.tanh %79 : vector<8x32xf32>
      %81 = arith.mulf %77, %arg26 : vector<8x32xf32>
      %82 = arith.mulf %76, %80 : vector<8x32xf32>
      %83 = arith.addf %81, %82 : vector<8x32xf32>
      %84 = math.tanh %83 : vector<8x32xf32>
      %85 = arith.mulf %78, %84 : vector<8x32xf32>
      %86 = arith.truncf %85 : vector<8x32xf32> to vector<8x32xbf16>
      %c2 = arith.constant 2 : index
      %c0_37 = arith.constant 0 : index
      %c0_38 = arith.constant 0 : index
      %87 = vector.load %arg5[%c2, %c0_37, %c0_38] : memref<11x65x128xbf16, #tpu.memory_space<vmem>>, vector<1x65x128xbf16>
      %88 = vector.shape_cast %87 : vector<1x65x128xbf16> to vector<65x128xbf16>
      %89 = tpu.concatenate %86, %arg15, %3 in 1 : vector<8x32xbf16>, vector<8x32xbf16>, vector<8x1xbf16> -> vector<8x65xbf16>
      %cst_39 = arith.constant dense<0.000000e+00> : vector<8x128xf32>
      %90 = tpu.matmul %89, %88, %cst_39 {dimension_numbers = #tpu.dot_dimension_numbers<[1], [0], [0], [1], [0, 0, 1, 1], [], []>} : vector<8x65xbf16>, vector<65x128xbf16>, vector<8x128xf32> -> vector<8x128xf32>
      %91 = arith.negf %90 : vector<8x128xf32>
      %92 = math.exp %91 : vector<8x128xf32>
      %cst_40 = arith.constant 1.000000e+00 : f32
      %93 = vector.broadcast %cst_40 : f32 to vector<8x128xf32>
      %94 = arith.addf %93, %92 : vector<8x128xf32>
      %95 = arith.divf %93, %94 : vector<8x128xf32>
      %96 = vector.extract_strided_slice %95 {offsets = [0, 0], sizes = [8, 32], strides = [1, 1]} : vector<8x128xf32> to vector<8x32xf32>
      %97 = vector.extract_strided_slice %95 {offsets = [0, 32], sizes = [8, 32], strides = [1, 1]} : vector<8x128xf32> to vector<8x32xf32>
      %98 = vector.extract_strided_slice %95 {offsets = [0, 96], sizes = [8, 32], strides = [1, 1]} : vector<8x128xf32> to vector<8x32xf32>
      %99 = vector.extract_strided_slice %90 {offsets = [0, 64], sizes = [8, 32], strides = [1, 1]} : vector<8x128xf32> to vector<8x32xf32>
      %100 = math.tanh %99 : vector<8x32xf32>
      %101 = arith.mulf %97, %arg27 : vector<8x32xf32>
      %102 = arith.mulf %96, %100 : vector<8x32xf32>
      %103 = arith.addf %101, %102 : vector<8x32xf32>
      %104 = math.tanh %103 : vector<8x32xf32>
      %105 = arith.mulf %98, %104 : vector<8x32xf32>
      %106 = arith.truncf %105 : vector<8x32xf32> to vector<8x32xbf16>
      %c3 = arith.constant 3 : index
      %c0_41 = arith.constant 0 : index
      %c0_42 = arith.constant 0 : index
      %107 = vector.load %arg5[%c3, %c0_41, %c0_42] : memref<11x65x128xbf16, #tpu.memory_space<vmem>>, vector<1x65x128xbf16>
      %108 = vector.shape_cast %107 : vector<1x65x128xbf16> to vector<65x128xbf16>
      %109 = tpu.concatenate %106, %arg16, %3 in 1 : vector<8x32xbf16>, vector<8x32xbf16>, vector<8x1xbf16> -> vector<8x65xbf16>
      %cst_43 = arith.constant dense<0.000000e+00> : vector<8x128xf32>
      %110 = tpu.matmul %109, %108, %cst_43 {dimension_numbers = #tpu.dot_dimension_numbers<[1], [0], [0], [1], [0, 0, 1, 1], [], []>} : vector<8x65xbf16>, vector<65x128xbf16>, vector<8x128xf32> -> vector<8x128xf32>
      %111 = arith.negf %110 : vector<8x128xf32>
      %112 = math.exp %111 : vector<8x128xf32>
      %cst_44 = arith.constant 1.000000e+00 : f32
      %113 = vector.broadcast %cst_44 : f32 to vector<8x128xf32>
      %114 = arith.addf %113, %112 : vector<8x128xf32>
      %115 = arith.divf %113, %114 : vector<8x128xf32>
      %116 = vector.extract_strided_slice %115 {offsets = [0, 0], sizes = [8, 32], strides = [1, 1]} : vector<8x128xf32> to vector<8x32xf32>
      %117 = vector.extract_strided_slice %115 {offsets = [0, 32], sizes = [8, 32], strides = [1, 1]} : vector<8x128xf32> to vector<8x32xf32>
      %118 = vector.extract_strided_slice %115 {offsets = [0, 96], sizes = [8, 32], strides = [1, 1]} : vector<8x128xf32> to vector<8x32xf32>
      %119 = vector.extract_strided_slice %110 {offsets = [0, 64], sizes = [8, 32], strides = [1, 1]} : vector<8x128xf32> to vector<8x32xf32>
      %120 = math.tanh %119 : vector<8x32xf32>
      %121 = arith.mulf %117, %arg28 : vector<8x32xf32>
      %122 = arith.mulf %116, %120 : vector<8x32xf32>
      %123 = arith.addf %121, %122 : vector<8x32xf32>
      %124 = math.tanh %123 : vector<8x32xf32>
      %125 = arith.mulf %118, %124 : vector<8x32xf32>
      %126 = arith.truncf %125 : vector<8x32xf32> to vector<8x32xbf16>
      %c4 = arith.constant 4 : index
      %c0_45 = arith.constant 0 : index
      %c0_46 = arith.constant 0 : index
      %127 = vector.load %arg5[%c4, %c0_45, %c0_46] : memref<11x65x128xbf16, #tpu.memory_space<vmem>>, vector<1x65x128xbf16>
      %128 = vector.shape_cast %127 : vector<1x65x128xbf16> to vector<65x128xbf16>
      %129 = tpu.concatenate %126, %arg17, %3 in 1 : vector<8x32xbf16>, vector<8x32xbf16>, vector<8x1xbf16> -> vector<8x65xbf16>
      %cst_47 = arith.constant dense<0.000000e+00> : vector<8x128xf32>
      %130 = tpu.matmul %129, %128, %cst_47 {dimension_numbers = #tpu.dot_dimension_numbers<[1], [0], [0], [1], [0, 0, 1, 1], [], []>} : vector<8x65xbf16>, vector<65x128xbf16>, vector<8x128xf32> -> vector<8x128xf32>
      %131 = arith.negf %130 : vector<8x128xf32>
      %132 = math.exp %131 : vector<8x128xf32>
      %cst_48 = arith.constant 1.000000e+00 : f32
      %133 = vector.broadcast %cst_48 : f32 to vector<8x128xf32>
      %134 = arith.addf %133, %132 : vector<8x128xf32>
      %135 = arith.divf %133, %134 : vector<8x128xf32>
      %136 = vector.extract_strided_slice %135 {offsets = [0, 0], sizes = [8, 32], strides = [1, 1]} : vector<8x128xf32> to vector<8x32xf32>
      %137 = vector.extract_strided_slice %135 {offsets = [0, 32], sizes = [8, 32], strides = [1, 1]} : vector<8x128xf32> to vector<8x32xf32>
      %138 = vector.extract_strided_slice %135 {offsets = [0, 96], sizes = [8, 32], strides = [1, 1]} : vector<8x128xf32> to vector<8x32xf32>
      %139 = vector.extract_strided_slice %130 {offsets = [0, 64], sizes = [8, 32], strides = [1, 1]} : vector<8x128xf32> to vector<8x32xf32>
      %140 = math.tanh %139 : vector<8x32xf32>
      %141 = arith.mulf %137, %arg29 : vector<8x32xf32>
      %142 = arith.mulf %136, %140 : vector<8x32xf32>
      %143 = arith.addf %141, %142 : vector<8x32xf32>
      %144 = math.tanh %143 : vector<8x32xf32>
      %145 = arith.mulf %138, %144 : vector<8x32xf32>
      %146 = arith.truncf %145 : vector<8x32xf32> to vector<8x32xbf16>
      %c5 = arith.constant 5 : index
      %c0_49 = arith.constant 0 : index
      %c0_50 = arith.constant 0 : index
      %147 = vector.load %arg5[%c5, %c0_49, %c0_50] : memref<11x65x128xbf16, #tpu.memory_space<vmem>>, vector<1x65x128xbf16>
      %148 = vector.shape_cast %147 : vector<1x65x128xbf16> to vector<65x128xbf16>
      %149 = tpu.concatenate %146, %arg18, %3 in 1 : vector<8x32xbf16>, vector<8x32xbf16>, vector<8x1xbf16> -> vector<8x65xbf16>
      %cst_51 = arith.constant dense<0.000000e+00> : vector<8x128xf32>
      %150 = tpu.matmul %149, %148, %cst_51 {dimension_numbers = #tpu.dot_dimension_numbers<[1], [0], [0], [1], [0, 0, 1, 1], [], []>} : vector<8x65xbf16>, vector<65x128xbf16>, vector<8x128xf32> -> vector<8x128xf32>
      %151 = arith.negf %150 : vector<8x128xf32>
      %152 = math.exp %151 : vector<8x128xf32>
      %cst_52 = arith.constant 1.000000e+00 : f32
      %153 = vector.broadcast %cst_52 : f32 to vector<8x128xf32>
      %154 = arith.addf %153, %152 : vector<8x128xf32>
      %155 = arith.divf %153, %154 : vector<8x128xf32>
      %156 = vector.extract_strided_slice %155 {offsets = [0, 0], sizes = [8, 32], strides = [1, 1]} : vector<8x128xf32> to vector<8x32xf32>
      %157 = vector.extract_strided_slice %155 {offsets = [0, 32], sizes = [8, 32], strides = [1, 1]} : vector<8x128xf32> to vector<8x32xf32>
      %158 = vector.extract_strided_slice %155 {offsets = [0, 96], sizes = [8, 32], strides = [1, 1]} : vector<8x128xf32> to vector<8x32xf32>
      %159 = vector.extract_strided_slice %150 {offsets = [0, 64], sizes = [8, 32], strides = [1, 1]} : vector<8x128xf32> to vector<8x32xf32>
      %160 = math.tanh %159 : vector<8x32xf32>
      %161 = arith.mulf %157, %arg30 : vector<8x32xf32>
      %162 = arith.mulf %156, %160 : vector<8x32xf32>
      %163 = arith.addf %161, %162 : vector<8x32xf32>
      %164 = math.tanh %163 : vector<8x32xf32>
      %165 = arith.mulf %158, %164 : vector<8x32xf32>
      %166 = arith.truncf %165 : vector<8x32xf32> to vector<8x32xbf16>
      %c6 = arith.constant 6 : index
      %c0_53 = arith.constant 0 : index
      %c0_54 = arith.constant 0 : index
      %167 = vector.load %arg5[%c6, %c0_53, %c0_54] : memref<11x65x128xbf16, #tpu.memory_space<vmem>>, vector<1x65x128xbf16>
      %168 = vector.shape_cast %167 : vector<1x65x128xbf16> to vector<65x128xbf16>
      %169 = tpu.concatenate %166, %arg19, %3 in 1 : vector<8x32xbf16>, vector<8x32xbf16>, vector<8x1xbf16> -> vector<8x65xbf16>
      %cst_55 = arith.constant dense<0.000000e+00> : vector<8x128xf32>
      %170 = tpu.matmul %169, %168, %cst_55 {dimension_numbers = #tpu.dot_dimension_numbers<[1], [0], [0], [1], [0, 0, 1, 1], [], []>} : vector<8x65xbf16>, vector<65x128xbf16>, vector<8x128xf32> -> vector<8x128xf32>
      %171 = arith.negf %170 : vector<8x128xf32>
      %172 = math.exp %171 : vector<8x128xf32>
      %cst_56 = arith.constant 1.000000e+00 : f32
      %173 = vector.broadcast %cst_56 : f32 to vector<8x128xf32>
      %174 = arith.addf %173, %172 : vector<8x128xf32>
      %175 = arith.divf %173, %174 : vector<8x128xf32>
      %176 = vector.extract_strided_slice %175 {offsets = [0, 0], sizes = [8, 32], strides = [1, 1]} : vector<8x128xf32> to vector<8x32xf32>
      %177 = vector.extract_strided_slice %175 {offsets = [0, 32], sizes = [8, 32], strides = [1, 1]} : vector<8x128xf32> to vector<8x32xf32>
      %178 = vector.extract_strided_slice %175 {offsets = [0, 96], sizes = [8, 32], strides = [1, 1]} : vector<8x128xf32> to vector<8x32xf32>
      %179 = vector.extract_strided_slice %170 {offsets = [0, 64], sizes = [8, 32], strides = [1, 1]} : vector<8x128xf32> to vector<8x32xf32>
      %180 = math.tanh %179 : vector<8x32xf32>
      %181 = arith.mulf %177, %arg31 : vector<8x32xf32>
      %182 = arith.mulf %176, %180 : vector<8x32xf32>
      %183 = arith.addf %181, %182 : vector<8x32xf32>
      %184 = math.tanh %183 : vector<8x32xf32>
      %185 = arith.mulf %178, %184 : vector<8x32xf32>
      %186 = arith.truncf %185 : vector<8x32xf32> to vector<8x32xbf16>
      %c7 = arith.constant 7 : index
      %c0_57 = arith.constant 0 : index
      %c0_58 = arith.constant 0 : index
      %187 = vector.load %arg5[%c7, %c0_57, %c0_58] : memref<11x65x128xbf16, #tpu.memory_space<vmem>>, vector<1x65x128xbf16>
      %188 = vector.shape_cast %187 : vector<1x65x128xbf16> to vector<65x128xbf16>
      %189 = tpu.concatenate %186, %arg20, %3 in 1 : vector<8x32xbf16>, vector<8x32xbf16>, vector<8x1xbf16> -> vector<8x65xbf16>
      %cst_59 = arith.constant dense<0.000000e+00> : vector<8x128xf32>
      %190 = tpu.matmul %189, %188, %cst_59 {dimension_numbers = #tpu.dot_dimension_numbers<[1], [0], [0], [1], [0, 0, 1, 1], [], []>} : vector<8x65xbf16>, vector<65x128xbf16>, vector<8x128xf32> -> vector<8x128xf32>
      %191 = arith.negf %190 : vector<8x128xf32>
      %192 = math.exp %191 : vector<8x128xf32>
      %cst_60 = arith.constant 1.000000e+00 : f32
      %193 = vector.broadcast %cst_60 : f32 to vector<8x128xf32>
      %194 = arith.addf %193, %192 : vector<8x128xf32>
      %195 = arith.divf %193, %194 : vector<8x128xf32>
      %196 = vector.extract_strided_slice %195 {offsets = [0, 0], sizes = [8, 32], strides = [1, 1]} : vector<8x128xf32> to vector<8x32xf32>
      %197 = vector.extract_strided_slice %195 {offsets = [0, 32], sizes = [8, 32], strides = [1, 1]} : vector<8x128xf32> to vector<8x32xf32>
      %198 = vector.extract_strided_slice %195 {offsets = [0, 96], sizes = [8, 32], strides = [1, 1]} : vector<8x128xf32> to vector<8x32xf32>
      %199 = vector.extract_strided_slice %190 {offsets = [0, 64], sizes = [8, 32], strides = [1, 1]} : vector<8x128xf32> to vector<8x32xf32>
      %200 = math.tanh %199 : vector<8x32xf32>
      %201 = arith.mulf %197, %arg32 : vector<8x32xf32>
      %202 = arith.mulf %196, %200 : vector<8x32xf32>
      %203 = arith.addf %201, %202 : vector<8x32xf32>
      %204 = math.tanh %203 : vector<8x32xf32>
      %205 = arith.mulf %198, %204 : vector<8x32xf32>
      %206 = arith.truncf %205 : vector<8x32xf32> to vector<8x32xbf16>
      %c8 = arith.constant 8 : index
      %c0_61 = arith.constant 0 : index
      %c0_62 = arith.constant 0 : index
      %207 = vector.load %arg5[%c8, %c0_61, %c0_62] : memref<11x65x128xbf16, #tpu.memory_space<vmem>>, vector<1x65x128xbf16>
      %208 = vector.shape_cast %207 : vector<1x65x128xbf16> to vector<65x128xbf16>
      %209 = tpu.concatenate %206, %arg21, %3 in 1 : vector<8x32xbf16>, vector<8x32xbf16>, vector<8x1xbf16> -> vector<8x65xbf16>
      %cst_63 = arith.constant dense<0.000000e+00> : vector<8x128xf32>
      %210 = tpu.matmul %209, %208, %cst_63 {dimension_numbers = #tpu.dot_dimension_numbers<[1], [0], [0], [1], [0, 0, 1, 1], [], []>} : vector<8x65xbf16>, vector<65x128xbf16>, vector<8x128xf32> -> vector<8x128xf32>
      %211 = arith.negf %210 : vector<8x128xf32>
      %212 = math.exp %211 : vector<8x128xf32>
      %cst_64 = arith.constant 1.000000e+00 : f32
      %213 = vector.broadcast %cst_64 : f32 to vector<8x128xf32>
      %214 = arith.addf %213, %212 : vector<8x128xf32>
      %215 = arith.divf %213, %214 : vector<8x128xf32>
      %216 = vector.extract_strided_slice %215 {offsets = [0, 0], sizes = [8, 32], strides = [1, 1]} : vector<8x128xf32> to vector<8x32xf32>
      %217 = vector.extract_strided_slice %215 {offsets = [0, 32], sizes = [8, 32], strides = [1, 1]} : vector<8x128xf32> to vector<8x32xf32>
      %218 = vector.extract_strided_slice %215 {offsets = [0, 96], sizes = [8, 32], strides = [1, 1]} : vector<8x128xf32> to vector<8x32xf32>
      %219 = vector.extract_strided_slice %210 {offsets = [0, 64], sizes = [8, 32], strides = [1, 1]} : vector<8x128xf32> to vector<8x32xf32>
      %220 = math.tanh %219 : vector<8x32xf32>
      %221 = arith.mulf %217, %arg33 : vector<8x32xf32>
      %222 = arith.mulf %216, %220 : vector<8x32xf32>
      %223 = arith.addf %221, %222 : vector<8x32xf32>
      %224 = math.tanh %223 : vector<8x32xf32>
      %225 = arith.mulf %218, %224 : vector<8x32xf32>
      %226 = arith.truncf %225 : vector<8x32xf32> to vector<8x32xbf16>
      %c9 = arith.constant 9 : index
      %c0_65 = arith.constant 0 : index
      %c0_66 = arith.constant 0 : index
      %227 = vector.load %arg5[%c9, %c0_65, %c0_66] : memref<11x65x128xbf16, #tpu.memory_space<vmem>>, vector<1x65x128xbf16>
      %228 = vector.shape_cast %227 : vector<1x65x128xbf16> to vector<65x128xbf16>
      %229 = tpu.concatenate %226, %arg22, %3 in 1 : vector<8x32xbf16>, vector<8x32xbf16>, vector<8x1xbf16> -> vector<8x65xbf16>
      %cst_67 = arith.constant dense<0.000000e+00> : vector<8x128xf32>
      %230 = tpu.matmul %229, %228, %cst_67 {dimension_numbers = #tpu.dot_dimension_numbers<[1], [0], [0], [1], [0, 0, 1, 1], [], []>} : vector<8x65xbf16>, vector<65x128xbf16>, vector<8x128xf32> -> vector<8x128xf32>
      %231 = arith.negf %230 : vector<8x128xf32>
      %232 = math.exp %231 : vector<8x128xf32>
      %cst_68 = arith.constant 1.000000e+00 : f32
      %233 = vector.broadcast %cst_68 : f32 to vector<8x128xf32>
      %234 = arith.addf %233, %232 : vector<8x128xf32>
      %235 = arith.divf %233, %234 : vector<8x128xf32>
      %236 = vector.extract_strided_slice %235 {offsets = [0, 0], sizes = [8, 32], strides = [1, 1]} : vector<8x128xf32> to vector<8x32xf32>
      %237 = vector.extract_strided_slice %235 {offsets = [0, 32], sizes = [8, 32], strides = [1, 1]} : vector<8x128xf32> to vector<8x32xf32>
      %238 = vector.extract_strided_slice %235 {offsets = [0, 96], sizes = [8, 32], strides = [1, 1]} : vector<8x128xf32> to vector<8x32xf32>
      %239 = vector.extract_strided_slice %230 {offsets = [0, 64], sizes = [8, 32], strides = [1, 1]} : vector<8x128xf32> to vector<8x32xf32>
      %240 = math.tanh %239 : vector<8x32xf32>
      %241 = arith.mulf %237, %arg34 : vector<8x32xf32>
      %242 = arith.mulf %236, %240 : vector<8x32xf32>
      %243 = arith.addf %241, %242 : vector<8x32xf32>
      %244 = math.tanh %243 : vector<8x32xf32>
      %245 = arith.mulf %238, %244 : vector<8x32xf32>
      %246 = arith.truncf %245 : vector<8x32xf32> to vector<8x32xbf16>
      %c10 = arith.constant 10 : index
      %c0_69 = arith.constant 0 : index
      %c0_70 = arith.constant 0 : index
      %247 = vector.load %arg5[%c10, %c0_69, %c0_70] : memref<11x65x128xbf16, #tpu.memory_space<vmem>>, vector<1x65x128xbf16>
      %248 = vector.shape_cast %247 : vector<1x65x128xbf16> to vector<65x128xbf16>
      %249 = tpu.concatenate %246, %arg23, %3 in 1 : vector<8x32xbf16>, vector<8x32xbf16>, vector<8x1xbf16> -> vector<8x65xbf16>
      %cst_71 = arith.constant dense<0.000000e+00> : vector<8x128xf32>
      %250 = tpu.matmul %249, %248, %cst_71 {dimension_numbers = #tpu.dot_dimension_numbers<[1], [0], [0], [1], [0, 0, 1, 1], [], []>} : vector<8x65xbf16>, vector<65x128xbf16>, vector<8x128xf32> -> vector<8x128xf32>
      %251 = arith.negf %250 : vector<8x128xf32>
      %252 = math.exp %251 : vector<8x128xf32>
      %cst_72 = arith.constant 1.000000e+00 : f32
      %253 = vector.broadcast %cst_72 : f32 to vector<8x128xf32>
      %254 = arith.addf %253, %252 : vector<8x128xf32>
      %255 = arith.divf %253, %254 : vector<8x128xf32>
      %256 = vector.extract_strided_slice %255 {offsets = [0, 0], sizes = [8, 32], strides = [1, 1]} : vector<8x128xf32> to vector<8x32xf32>
      %257 = vector.extract_strided_slice %255 {offsets = [0, 32], sizes = [8, 32], strides = [1, 1]} : vector<8x128xf32> to vector<8x32xf32>
      %258 = vector.extract_strided_slice %255 {offsets = [0, 96], sizes = [8, 32], strides = [1, 1]} : vector<8x128xf32> to vector<8x32xf32>
      %259 = vector.extract_strided_slice %250 {offsets = [0, 64], sizes = [8, 32], strides = [1, 1]} : vector<8x128xf32> to vector<8x32xf32>
      %260 = math.tanh %259 : vector<8x32xf32>
      %261 = arith.mulf %257, %arg35 : vector<8x32xf32>
      %262 = arith.mulf %256, %260 : vector<8x32xf32>
      %263 = arith.addf %261, %262 : vector<8x32xf32>
      %264 = math.tanh %263 : vector<8x32xf32>
      %265 = arith.mulf %258, %264 : vector<8x32xf32>
      %266 = arith.truncf %265 : vector<8x32xf32> to vector<8x32xbf16>
      %267 = tpu.concatenate %266, %3 in 1 : vector<8x32xbf16>, vector<8x1xbf16> -> vector<8x33xbf16>
      %c0_73 = arith.constant 0 : index
      %c0_74 = arith.constant 0 : index
      %268 = vector.load %arg6[%c0_73, %c0_74] : memref<33x128xbf16, #tpu.memory_space<vmem>>, vector<33x128xbf16>
      %cst_75 = arith.constant dense<0.000000e+00> : vector<8x128xf32>
      %269 = tpu.matmul %267, %268, %cst_75 {dimension_numbers = #tpu.dot_dimension_numbers<[1], [0], [0], [1], [0, 0, 1, 1], [], []>} : vector<8x33xbf16>, vector<33x128xbf16>, vector<8x128xf32> -> vector<8x128xf32>
      %c2_i32 = arith.constant 2 : i32
      %270 = arith.cmpi sge, %arg10, %c2_i32 : i32
      %271 = arith.extui %270 : i1 to i32
      %c0_i32_76 = arith.constant 0 : i32
      %272 = arith.cmpi ne, %271, %c0_i32_76 : i32
      scf.if %272 {
        %c0_i32_86 = arith.constant 0 : i32
        %c0_i32_87 = arith.constant 0 : i32
        %c0_i32_88 = arith.constant 0 : i32
        %296 = tpu.memref_slice %arg8[%24, %c0_i32_86, %c0_i32_87, %c0_i32_88] : memref<2x8x1x128xf32, #tpu.memory_space<vmem>> -> memref<1x8x1x128xf32, #tpu.memory_space<vmem>>
        %297 = tpu.memref_squeeze %296 : memref<1x8x1x128xf32, #tpu.memory_space<vmem>> -> memref<8x1x128xf32, #tpu.memory_space<vmem>>
        %c0_i32_89 = arith.constant 0 : i32
        %c0_i32_90 = arith.constant 0 : i32
        %298 = tpu.memref_slice %arg7[%1, %c0_i32_89, %c0_i32_90] : memref<8x8x128xf32, #tpu.memory_space<any>> -> memref<8x1x128xf32, #tpu.memory_space<any>>
        %299 = tpu.memref_slice %arg9[%24] : memref<2x!tpu.dma_semaphore, #tpu.memory_space<semaphore_mem>> -> memref<1x!tpu.dma_semaphore, #tpu.memory_space<semaphore_mem>>
        %300 = tpu.memref_squeeze %299 : memref<1x!tpu.dma_semaphore, #tpu.memory_space<semaphore_mem>> -> memref<!tpu.dma_semaphore, #tpu.memory_space<semaphore_mem>>
        tpu.wait_dma2 semaphore(%300 : memref<!tpu.dma_semaphore, #tpu.memory_space<semaphore_mem>>) src(%297 : memref<8x1x128xf32, #tpu.memory_space<vmem>>) dst(%298 : memref<8x1x128xf32, #tpu.memory_space<any>>)
      } else {
      }
      %273 = vector.shape_cast %269 : vector<8x128xf32> to vector<8x1x128xf32>
      %274 = arith.index_cast %24 : i32 to index
      %c0_77 = arith.constant 0 : index
      %c0_78 = arith.constant 0 : index
      %c0_79 = arith.constant 0 : index
      %275 = vector.load %arg8[%274, %c0_77, %c0_78, %c0_79] : memref<2x8x1x128xf32, #tpu.memory_space<vmem>>, vector<1x8x1x128xf32>
      %276 = vector.shape_cast %275 : vector<1x8x1x128xf32> to vector<8x1x128xf32>
      %277 = vector.shape_cast %273 : vector<8x1x128xf32> to vector<1x8x1x128xf32>
      tpu.vector_store %arg8[%274, %c0_77, %c0_78, %c0_79], %277 {strides = array<i32>} : memref<2x8x1x128xf32, #tpu.memory_space<vmem>>, vector<1x8x1x128xf32>,
      %c0_i32_80 = arith.constant 0 : i32
      %c0_i32_81 = arith.constant 0 : i32
      %c0_i32_82 = arith.constant 0 : i32
      %278 = tpu.memref_slice %arg8[%24, %c0_i32_80, %c0_i32_81, %c0_i32_82] : memref<2x8x1x128xf32, #tpu.memory_space<vmem>> -> memref<1x8x1x128xf32, #tpu.memory_space<vmem>>
      %279 = tpu.memref_squeeze %278 : memref<1x8x1x128xf32, #tpu.memory_space<vmem>> -> memref<8x1x128xf32, #tpu.memory_space<vmem>>
      %c0_i32_83 = arith.constant 0 : i32
      %280 = tpu.memref_slice %arg7[%1, %arg10, %c0_i32_83] : memref<8x8x128xf32, #tpu.memory_space<any>> -> memref<8x1x128xf32, #tpu.memory_space<any>>
      %281 = tpu.memref_slice %arg9[%24] : memref<2x!tpu.dma_semaphore, #tpu.memory_space<semaphore_mem>> -> memref<1x!tpu.dma_semaphore, #tpu.memory_space<semaphore_mem>>
      %282 = tpu.memref_squeeze %281 : memref<1x!tpu.dma_semaphore, #tpu.memory_space<semaphore_mem>> -> memref<!tpu.dma_semaphore, #tpu.memory_space<semaphore_mem>>
      tpu.enqueue_dma source(%279 : memref<8x1x128xf32, #tpu.memory_space<vmem>>) target(%280 : memref<8x1x128xf32, #tpu.memory_space<any>>) target_semaphore(%282 : memref<!tpu.dma_semaphore, #tpu.memory_space<semaphore_mem>>)
      %cst_84 = arith.constant dense<0xFF800000> : vector<8xf32>
      %283 = vector.multi_reduction <maximumf>, %269, %cst_84 [1] : vector<8x128xf32> to vector<8xf32>
      %284 = vector.shape_cast %283 : vector<8xf32> to vector<8x1xf32>
      %285 = vector.broadcast %284 : vector<8x1xf32> to vector<8x128xf32>
      %286 = arith.cmpf oeq, %269, %285 : vector<8x128xf32>
      %c128_i32 = arith.constant 128 : i32
      %287 = vector.broadcast %c128_i32 : i32 to vector<8x128xi32>
      %288 = arith.select %286, %2, %287 : vector<8x128xi1>, vector<8x128xi32>
      %cst_85 = arith.constant dense<2147483647> : vector<8xi32>
      %289 = vector.multi_reduction <minsi>, %288, %cst_85 [1] : vector<8x128xi32> to vector<8xi32>
      %290 = vector.shape_cast %289 : vector<8xi32> to vector<8x1xi32>
      %291 = vector.broadcast %290 : vector<8x1xi32> to vector<8x128xi32>
      %292 = arith.cmpi eq, %2, %291 : vector<8x128xi32>
      %293 = arith.extui %292 : vector<8x128xi1> to vector<8x128xi32>
      %294 = arith.sitofp %293 : vector<8x128xi32> to vector<8x128xf32>
      %295 = arith.truncf %294 : vector<8x128xf32> to vector<8x128xbf16>
      scf.yield %295, %46, %66, %86, %106, %126, %146, %166, %186, %206, %226, %246, %266, %43, %63, %83, %103, %123, %143, %163, %183, %203, %223, %243, %263 : vector<8x128xbf16>, vector<8x32xbf16>, vector<8x32xbf16>, vector<8x32xbf16>, vector<8x32xbf16>, vector<8x32xbf16>, vector<8x32xbf16>, vector<8x32xbf16>, vector<8x32xbf16>, vector<8x32xbf16>, vector<8x32xbf16>, vector<8x32xbf16>, vector<8x32xbf16>, vector<8x32xf32>, vector<8x32xf32>, vector<8x32xf32>, vector<8x32xf32>, vector<8x32xf32>, vector<8x32xf32>, vector<8x32xf32>, vector<8x32xf32>, vector<8x32xf32>, vector<8x32xf32>, vector<8x32xf32>, vector<8x32xf32>
    }
    %c8_i32_5 = arith.constant 8 : i32
    %c0_i32_6 = arith.constant 0 : i32
    %c0_i32_7 = arith.constant 0 : i32
    %c0_i32_8 = arith.constant 0 : i32
    %c0_i32_9 = arith.constant 0 : i32
    %c0_i32_10 = arith.constant 0 : i32
    %14 = tpu.memref_slice %arg8[%c0_i32_6, %c0_i32_8, %c0_i32_9, %c0_i32_10] : memref<2x8x1x128xf32, #tpu.memory_space<vmem>> -> memref<1x8x1x128xf32, #tpu.memory_space<vmem>>
    %15 = tpu.memref_squeeze %14 : memref<1x8x1x128xf32, #tpu.memory_space<vmem>> -> memref<8x1x128xf32, #tpu.memory_space<vmem>>
    %c0_i32_11 = arith.constant 0 : i32
    %c0_i32_12 = arith.constant 0 : i32
    %16 = tpu.memref_slice %arg7[%1, %c0_i32_11, %c0_i32_12] : memref<8x8x128xf32, #tpu.memory_space<any>> -> memref<8x1x128xf32, #tpu.memory_space<any>>
    %17 = tpu.memref_slice %arg9[%c0_i32_7] : memref<2x!tpu.dma_semaphore, #tpu.memory_space<semaphore_mem>> -> memref<1x!tpu.dma_semaphore, #tpu.memory_space<semaphore_mem>>
    %18 = tpu.memref_squeeze %17 : memref<1x!tpu.dma_semaphore, #tpu.memory_space<semaphore_mem>> -> memref<!tpu.dma_semaphore, #tpu.memory_space<semaphore_mem>>
    tpu.wait_dma2 semaphore(%18 : memref<!tpu.dma_semaphore, #tpu.memory_space<semaphore_mem>>) src(%15 : memref<8x1x128xf32, #tpu.memory_space<vmem>>) dst(%16 : memref<8x1x128xf32, #tpu.memory_space<any>>)
    %c1_i32_13 = arith.constant 1 : i32
    %c1_i32_14 = arith.constant 1 : i32
    %c0_i32_15 = arith.constant 0 : i32
    %c0_i32_16 = arith.constant 0 : i32
    %c0_i32_17 = arith.constant 0 : i32
    %19 = tpu.memref_slice %arg8[%c1_i32_13, %c0_i32_15, %c0_i32_16, %c0_i32_17] : memref<2x8x1x128xf32, #tpu.memory_space<vmem>> -> memref<1x8x1x128xf32, #tpu.memory_space<vmem>>
    %20 = tpu.memref_squeeze %19 : memref<1x8x1x128xf32, #tpu.memory_space<vmem>> -> memref<8x1x128xf32, #tpu.memory_space<vmem>>
    %c0_i32_18 = arith.constant 0 : i32
    %c0_i32_19 = arith.constant 0 : i32
    %21 = tpu.memref_slice %arg7[%1, %c0_i32_18, %c0_i32_19] : memref<8x8x128xf32, #tpu.memory_space<any>> -> memref<8x1x128xf32, #tpu.memory_space<any>>
    %22 = tpu.memref_slice %arg9[%c1_i32_14] : memref<2x!tpu.dma_semaphore, #tpu.memory_space<semaphore_mem>> -> memref<1x!tpu.dma_semaphore, #tpu.memory_space<semaphore_mem>>
    %23 = tpu.memref_squeeze %22 : memref<1x!tpu.dma_semaphore, #tpu.memory_space<semaphore_mem>> -> memref<!tpu.dma_semaphore, #tpu.memory_space<semaphore_mem>>
    tpu.wait_dma2 semaphore(%23 : memref<!tpu.dma_semaphore, #tpu.memory_space<semaphore_mem>>) src(%20 : memref<8x1x128xf32, #tpu.memory_space<vmem>>) dst(%21 : memref<8x1x128xf32, #tpu.memory_space<any>>)
    return
  }
  func.func @transform_0(%arg0: i32) -> (i32, i32) {
    %c0_i32 = arith.constant 0 : i32
    %c0_i32_0 = arith.constant 0 : i32
    return %arg0, %c0_i32 : i32, i32
  }
  func.func @transform_1(%arg0: i32) -> (i32, i32) {
    %c0_i32 = arith.constant 0 : i32
    %c0_i32_0 = arith.constant 0 : i32
    return %arg0, %c0_i32 : i32, i32
  }
  func.func @transform_2(%arg0: i32) -> (i32, i32) {
    %c0_i32 = arith.constant 0 : i32
    %c0_i32_0 = arith.constant 0 : i32
    %c0_i32_1 = arith.constant 0 : i32
    return %c0_i32, %c0_i32_0 : i32, i32
  }
  func.func @transform_3(%arg0: i32) -> (i32, i32) {
    %c0_i32 = arith.constant 0 : i32
    %c0_i32_0 = arith.constant 0 : i32
    %c0_i32_1 = arith.constant 0 : i32
    return %c0_i32, %c0_i32_0 : i32, i32
  }
  func.func @transform_4(%arg0: i32) -> (i32, i32, i32) {
    %c0_i32 = arith.constant 0 : i32
    %c0_i32_0 = arith.constant 0 : i32
    %c0_i32_1 = arith.constant 0 : i32
    %c0_i32_2 = arith.constant 0 : i32
    return %c0_i32, %c0_i32_0, %c0_i32_1 : i32, i32, i32
  }
  func.func @transform_5(%arg0: i32) -> (i32, i32) {
    %c0_i32 = arith.constant 0 : i32
    %c0_i32_0 = arith.constant 0 : i32
    %c0_i32_1 = arith.constant 0 : i32
    return %c0_i32, %c0_i32_0 : i32, i32
  }
}

</mosaic_0001>

<llo_original>
// kernel: decoder_forward.1
$region0: #{decoder_forward.1}
  #allocation0 [shape = 'u32[]', space=smem, size = 0x4, offset = 0x4, fixed_abs, tag = 'smem constant byte address 0x4 - core index']
  #allocation1 [shape = 'u32[144,128]{1,0:T(1,128)}', space=vmem, size = 0x12000, scoped, tag = 'internal scratch']
  #allocation2 [shape = 'f32[2,8,1,128]{3,2,1,0:T(1,128)}', space=vmem, size = 0x2000, scoped, tag = 'scratch operand']
  #allocation3 [shape = 's32[2]{0}', space=sflag, size = 0x8, scoped, tag = 'scratch operand']
  #allocation4 [shape = 's32[]', space=sflag, size = 0x4, offset = 0, fixed_abs, tag = 'sflag constant byte address 0x0 - dummy sync flag']
  %s0 = inlined_call_operand.vmem [shape: f32[8,32], index: 0, kind: input, shape index: {}]
  %s1 = inlined_call_operand.vmem [shape: f32[8,32], index: 1, kind: input, shape index: {}]
  %s2 = inlined_call_operand.vmem [shape: bf16[128,16], index: 2, kind: input, shape index: {}]
  %s3 = inlined_call_operand.vmem [shape: bf16[49,128], index: 3, kind: input, shape index: {}]
  %s4 = inlined_call_operand.vmem [shape: bf16[11,65,128], index: 4, kind: input, shape index: {}]
  %s5 = inlined_call_operand.vmem [shape: bf16[33,128], index: 5, kind: input, shape index: {}]
  %s6 = inlined_call_operand.vmem [shape: f32[8,8,128], index: 6, kind: output, shape index: {}]
  %s7 = sld [smem:[#allocation0]]
  $region74: #{decoder_forward.1} parent=0
    _
  %s9 = ssub.s32 1, %s7
  %s10 = scalar_select 0, %s9, %s7
  // Predicated region
  $region2: #{decoder_forward.1} parent=0 // pred_check
    _
  $region3: #{decoder_forward.1} parent=0 // pred_check_branch
    %12 = sbr.rel (0) target = $region5
  $region4: #{decoder_forward.1} parent=0 // pred_region
    _
  $region5: #{decoder_forward.1} parent=0 // pred_fallthru
    _
  // Predicated region
  $region6: #{decoder_forward.1} parent=0 // pred_check
    _
  $region7: #{decoder_forward.1} parent=0 // pred_check_branch
    %14 = sbr.rel (0) target = $region9
  $region8: #{decoder_forward.1} parent=0 // pred_region
    _
  $region9: #{decoder_forward.1} parent=0 // pred_fallthru
    _
  // Predicated region
  $region10: #{decoder_forward.1} parent=0 // pred_check
    _
  $region11: #{decoder_forward.1} parent=0 // pred_check_branch
    %16 = sbr.rel (0) target = $region13
  $region12: #{decoder_forward.1} parent=0 // pred_region
    _
  $region13: #{decoder_forward.1} parent=0 // pred_fallthru
    _
  // Predicated region
  $region14: #{decoder_forward.1} parent=0 // pred_check
    _
  $region15: #{decoder_forward.1} parent=0 // pred_check_branch
    %18 = sbr.rel (0) target = $region17
  $region16: #{decoder_forward.1} parent=0 // pred_region
    _
  $region17: #{decoder_forward.1} parent=0 // pred_fallthru
    _
  // Predicated region
  $region18: #{decoder_forward.1} parent=0 // pred_check
    _
  $region19: #{decoder_forward.1} parent=0 // pred_check_branch
    %20 = sbr.rel (0) target = $region21
  $region20: #{decoder_forward.1} parent=0 // pred_region
    _
  $region21: #{decoder_forward.1} parent=0 // pred_fallthru
    _
  // Predicated region
  $region22: #{decoder_forward.1} parent=0 // pred_check
    _
  $region23: #{decoder_forward.1} parent=0 // pred_check_branch
    %22 = sbr.rel (0) target = $region25
  $region24: #{decoder_forward.1} parent=0 // pred_region
    _
  $region25: #{decoder_forward.1} parent=0 // pred_fallthru
    _
  %s25 = smul.u32 0, 8
  %v26 = vlaneseq
  %v27 = vand.u32 %v26, 127
  %v28 = vld [vmem:[%s0] sm:$0xff]
  %v29 = vpack.c.bf16 %v28, %v28
  %v30 = vld [vmem:[%s1] sm:$0xff]
  %vm31 = vcmp.eq.s32.totalorder %v27, 1
  %v32 = vsel %vm31, 1, 0
  %v33 = vcvt.s32.f32 %v32
  %v34 = vpack.c.bf16 %v33, %v33
  loop: start=0, step=1, limit=8
  $region26: #{decoder_forward.1} parent=0 // loop_pre_header
    _
  $region27: #{decoder_forward.1} parent=0 // loop_header
    %s36 = sphi 0, %s40
    %p37 = scmp.ge.s32.totalorder %s36, 8
    %v41 = vphi %v34, %v1874
    %v42 = vphi %v29, %v299
    %v43 = vphi %v29, %v423
    %v44 = vphi %v29, %v544
    %v45 = vphi %v29, %v665
    %v46 = vphi %v29, %v786
    %v47 = vphi %v29, %v907
    %v48 = vphi %v29, %v1028
    %v49 = vphi %v29, %v1149
    %v50 = vphi %v29, %v1270
    %v51 = vphi %v29, %v1391
    %v52 = vphi %v29, %v1512
    %v53 = vphi %v29, %v1623
    %v54 = vphi %v30, %v1889
    %v55 = vphi %v30, %v1893
    %v56 = vphi %v30, %v1897
    %v57 = vphi %v30, %v1901
    %v58 = vphi %v30, %v1905
    %v59 = vphi %v30, %v1909
    %v60 = vphi %v30, %v1913
    %v61 = vphi %v30, %v1917
    %v62 = vphi %v30, %v1921
    %v63 = vphi %v30, %v1925
    %v64 = vphi %v30, %v1929
    %v65 = vphi %v30, %v1933
  $region28: #{decoder_forward.1} parent=0 // loop_header_branch
    %39 = sbr.rel (%p37) target = $region32
  $region29: #{decoder_forward.1} parent=0 // loop_body
    %s66 = sand.u32 %s36, 1
    %v67 = vld [vmem:[%s2] sm:$0xf]
    %v68 = vld [vmem:[%s2 + $0x4] sm:$0xf]
    %v69 = vld [vmem:[%s2 + $0x8] sm:$0xf]
    %v70 = vld [vmem:[%s2 + $0xc] sm:$0xf]
    %v71 = vld [vmem:[%s2 + $0x10] sm:$0xf]
    %v72 = vld [vmem:[%s2 + $0x14] sm:$0xf]
    %v73 = vld [vmem:[%s2 + $0x18] sm:$0xf]
    %v74 = vld [vmem:[%s2 + $0x1c] sm:$0xf]
    %v75 = vld [vmem:[%s2 + $0x20] sm:$0xf]
    %v76 = vld [vmem:[%s2 + $0x24] sm:$0xf]
    %v77 = vld [vmem:[%s2 + $0x28] sm:$0xf]
    %v78 = vld [vmem:[%s2 + $0x2c] sm:$0xf]
    %v79 = vld [vmem:[%s2 + $0x30] sm:$0xf]
    %v80 = vld [vmem:[%s2 + $0x34] sm:$0xf]
    %v81 = vld [vmem:[%s2 + $0x38] sm:$0xf]
    %v82 = vld [vmem:[%s2 + $0x3c] sm:$0xf]
    %v99 = vunpack.c.l.b16 %v67
    %v100 = vunpack.c.l.b16 %v68
    %v101 = vunpack.c.l.b16 %v69
    %v102 = vunpack.c.l.b16 %v70
    %v103 = vunpack.c.l.b16 %v71
    %v104 = vunpack.c.l.b16 %v72
    %v105 = vunpack.c.l.b16 %v73
    %v106 = vunpack.c.l.b16 %v74
    %v107 = vunpack.c.l.b16 %v75
    %v108 = vunpack.c.l.b16 %v76
    %v109 = vunpack.c.l.b16 %v77
    %v110 = vunpack.c.l.b16 %v78
    %v111 = vunpack.c.l.b16 %v79
    %v112 = vunpack.c.l.b16 %v80
    %v113 = vunpack.c.l.b16 %v81
    %v114 = vunpack.c.l.b16 %v82
    %v115 = vpack.c.b16 %v100, %v99
    %v116 = vpack.c.b16 %v102, %v101
    %v117 = vpack.c.b16 %v104, %v103
    %v118 = vpack.c.b16 %v106, %v105
    %v119 = vpack.c.b16 %v108, %v107
    %v120 = vpack.c.b16 %v110, %v109
    %v121 = vpack.c.b16 %v112, %v111
    %v122 = vpack.c.b16 %v114, %v113
    %131 = vmatprep.subr.bf16.mxu0 0
    %132 = vmatpush1.bf16.msra.mxu0 %v115
    %133 = vmatprep.subr.bf16.mxu0 0
    %134 = vmatpush1.bf16.msra.mxu0 %v116
    %135 = vmatprep.subr.bf16.mxu0 0
    %136 = vmatpush1.bf16.msra.mxu0 %v117
    %137 = vmatprep.subr.bf16.mxu0 0
    %138 = vmatpush1.bf16.msra.mxu0 %v118
    %139 = vmatprep.subr.bf16.mxu0 0
    %140 = vmatpush1.bf16.msra.mxu0 %v119
    %141 = vmatprep.subr.bf16.mxu0 0
    %142 = vmatpush1.bf16.msra.mxu0 %v120
    %143 = vmatprep.subr.bf16.mxu0 0
    %144 = vmatpush1.bf16.msra.mxu0 %v121
    %145 = vmatprep.subr.bf16.mxu0 0
    %146 = vmatpush1.bf16.msra.mxu0 %v122
    %147 = vmatprep.subr.bf16.mxu0 0
    %148 = vmatpush1.bf16.msra.mxu0 0
    %149 = vmatprep.subr.bf16.mxu0 0
    %150 = vmatpush1.bf16.msra.mxu0 0
    %151 = vmatprep.subr.bf16.mxu0 0
    %152 = vmatpush1.bf16.msra.mxu0 0
    %153 = vmatprep.subr.bf16.mxu0 0
    %154 = vmatpush1.bf16.msra.mxu0 0
    %155 = vmatprep.subr.bf16.mxu0 0
    %156 = vmatpush1.bf16.msra.mxu0 0
    %157 = vmatprep.subr.bf16.mxu0 0
    %158 = vmatpush1.bf16.msra.mxu0 0
    %159 = vmatprep.subr.bf16.mxu0 0
    %160 = vmatpush1.bf16.msra.mxu0 0
    %161 = vmatprep.subr.bf16.mxu0 0
    %162 = vmatpush1.bf16.msra.mxu0 0
    %163 = vmatprep.mubr.bf16.mxu0 0
    %164 = vmatmul.mubr.bf16.gmra.mrb[0].mxu0 %v41
    %v165 = vpop.f32.mrb[0].mxu0
    %v166 = vadd.f32 0.0, %v165
    %v167 = vpop.f32.mrb[0].mxu0
    %v168 = vpop.f32.mrb[0].mxu0
    %v169 = vpop.f32.mrb[0].mxu0
    %170 = vdwg.mxu0
    %v171 = vpack.c.bf16 %v166, %v166
    %v172 = vld [vmem:[%s3] sm:$0xf]
    %v173 = vld [vmem:[%s3 + $0x4] sm:$0xf]
    %v174 = vld [vmem:[%s3 + $0x8] sm:$0xf]
    %v175 = vld [vmem:[%s3 + $0xc] sm:$0xf]
    %v176 = vld [vmem:[%s3 + $0x10] sm:$0xf]
    %v177 = vld [vmem:[%s3 + $0x14] sm:$0xf]
    %v178 = vld [vmem:[%s3 + $0x18] sm:$0x1]
    %180 = vrot.lane.b32.xlu0 %v42, 16
    %v181 = vpop.permute.xlu0 %180
    %vm182 = vcmask 130048
    %v185 = vsel %vm182, %v171, %v181
    %vm186 = vcmask 392192
    %v188 = vsel %vm186, %v185, 1065369472
    %v196 = vunpack.c.l.b16 %v172
    %v197 = vunpack.c.l.b16 %v173
    %v198 = vunpack.c.l.b16 %v174
    %v199 = vunpack.c.l.b16 %v175
    %v200 = vunpack.c.l.b16 %v176
    %v201 = vunpack.c.l.b16 %v177
    %v202 = vunpack.c.l.b16 %v178
    %v203 = vpack.c.b16 %v197, %v196
    %v204 = vpack.c.b16 %v199, %v198
    %v205 = vpack.c.b16 %v201, %v200
    %v206 = vpack.c.b16 %v202, %v202
    %vm210 = vcmask 400384
    %v211 = vsel %vm210, %v188, 0
    %vm213 = vcmask 1040384
    %v214 = vsel 0, 4294967295, 65535
    %v215 = vsel %vm213, %v214, 0
    %v217 = vand.u32 %v206, %v215
    %219 = vmatprep.subr.bf16.mxu0 0
    %220 = vmatpush1.bf16.msra.mxu0 %v203
    %221 = vmatprep.subr.bf16.mxu0 0
    %222 = vmatpush1.bf16.msra.mxu0 %v204
    %223 = vmatprep.subr.bf16.mxu0 0
    %224 = vmatpush1.bf16.msra.mxu0 %v205
    %225 = vmatprep.subr.bf16.mxu0 0
    %226 = vmatpush1.bf16.msra.mxu0 %v217
    %227 = vmatprep.subr.bf16.mxu0 0
    %228 = vmatpush1.bf16.msra.mxu0 0
    %229 = vmatprep.subr.bf16.mxu0 0
    %230 = vmatpush1.bf16.msra.mxu0 0
    %231 = vmatprep.subr.bf16.mxu0 0
    %232 = vmatpush1.bf16.msra.mxu0 0
    %233 = vmatprep.subr.bf16.mxu0 0
    %234 = vmatpush1.bf16.msra.mxu0 0
    %235 = vmatprep.subr.bf16.mxu0 0
    %236 = vmatpush1.bf16.msra.mxu0 0
    %237 = vmatprep.subr.bf16.mxu0 0
    %238 = vmatpush1.bf16.msra.mxu0 0
    %239 = vmatprep.subr.bf16.mxu0 0
    %240 = vmatpush1.bf16.msra.mxu0 0
    %241 = vmatprep.subr.bf16.mxu0 0
    %242 = vmatpush1.bf16.msra.mxu0 0
    %243 = vmatprep.subr.bf16.mxu0 0
    %244 = vmatpush1.bf16.msra.mxu0 0
    %245 = vmatprep.subr.bf16.mxu0 0
    %246 = vmatpush1.bf16.msra.mxu0 0
    %247 = vmatprep.subr.bf16.mxu0 0
    %248 = vmatpush1.bf16.msra.mxu0 0
    %249 = vmatprep.subr.bf16.mxu0 0
    %250 = vmatpush1.bf16.msra.mxu0 0
    %251 = vmatprep.mubr.bf16.mxu0 0
    %252 = vmatmul.mubr.bf16.gmra.mrb[0].mxu0 %v211
    %v253 = vpop.f32.mrb[0].mxu0
    %v254 = vadd.f32 0.0, %v253
    %v255 = vpop.f32.mrb[0].mxu0
    %v256 = vpop.f32.mrb[0].mxu0
    %v257 = vpop.f32.mrb[0].mxu0
    %258 = vdwg.mxu0
    %v259 = vxor.u32 %v254, 2147483648
    %v260 = vmul.f32 %v259, 1.442695
    %v261 = vpow.pop %v260
    %v262 = vadd.f32 %v261, 1.0
    %v263 = vrcp.pop %v262
    %v264 = vmul.f32 1.0, %v263
    %v265 = vtanh.pop %v254
    %267 = vrot.lane.b32.xlu0 %v54, 32
    %v268 = vpop.permute.xlu0 %267
    %v270 = vmul.f32 %v264, %v268
    %272 = vrot.lane.b32.xlu0 %v265, 64
    %v273 = vpop.permute.xlu0 %272
    %v275 = vmul.f32 %v264, %v273
    %277 = vrot.lane.b32.xlu0 %v275, 32
    %v278 = vpop.permute.xlu0 %277
    %v280 = vadd.f32 %v270, %v278
    %v281 = vtanh.pop %v280
    %283 = vrot.lane.b32.xlu0 %v281, 64
    %v284 = vpop.permute.xlu0 %283
    %v286 = vmul.f32 %v264, %v284
    %v287 = vpack.c.bf16 %v286, %v286
    %v288 = vld [vmem:[%s4] sm:$0xf]
    %v289 = vld [vmem:[%s4 + $0x4] sm:$0xf]
    %v290 = vld [vmem:[%s4 + $0x8] sm:$0xf]
    %v291 = vld [vmem:[%s4 + $0xc] sm:$0xf]
    %v292 = vld [vmem:[%s4 + $0x10] sm:$0xf]
    %v293 = vld [vmem:[%s4 + $0x14] sm:$0xf]
    %v294 = vld [vmem:[%s4 + $0x18] sm:$0xf]
    %v295 = vld [vmem:[%s4 + $0x1c] sm:$0xf]
    %v296 = vld [vmem:[%s4 + $0x20] sm:$0x1]
    %298 = vrot.lane.b32.xlu0 %v287, 32
    %v299 = vpop.permute.xlu0 %298
    %301 = vrot.lane.b32.xlu0 %v43, 32
    %v302 = vpop.permute.xlu0 %301
    %vm303 = vcmask 261120
    %v306 = vsel %vm303, %v299, %v302
    %vm307 = vcmask 523264
    %v308 = vsel %vm307, %v306, 1065369472
    %v318 = vunpack.c.l.b16 %v288
    %v319 = vunpack.c.l.b16 %v289
    %v320 = vunpack.c.l.b16 %v290
    %v321 = vunpack.c.l.b16 %v291
    %v322 = vunpack.c.l.b16 %v292
    %v323 = vunpack.c.l.b16 %v293
    %v324 = vunpack.c.l.b16 %v294
    %v325 = vunpack.c.l.b16 %v295
    %v326 = vunpack.c.l.b16 %v296
    %v327 = vpack.c.b16 %v319, %v318
    %v328 = vpack.c.b16 %v321, %v320
    %v329 = vpack.c.b16 %v323, %v322
    %v330 = vpack.c.b16 %v325, %v324
    %v331 = vpack.c.b16 %v326, %v326
    %vm336 = vcmask 531456
    %v337 = vsel %vm336, %v308, 0
    %v340 = vand.u32 %v331, %v215
    %342 = vmatprep.subr.bf16.mxu0 0
    %343 = vmatpush1.bf16.msra.mxu0 %v327
    %344 = vmatprep.subr.bf16.mxu0 0
    %345 = vmatpush1.bf16.msra.mxu0 %v328
    %346 = vmatprep.subr.bf16.mxu0 0
    %347 = vmatpush1.bf16.msra.mxu0 %v329
    %348 = vmatprep.subr.bf16.mxu0 0
    %349 = vmatpush1.bf16.msra.mxu0 %v330
    %350 = vmatprep.subr.bf16.mxu0 0
    %351 = vmatpush1.bf16.msra.mxu0 %v340
    %352 = vmatprep.subr.bf16.mxu0 0
    %353 = vmatpush1.bf16.msra.mxu0 0
    %354 = vmatprep.subr.bf16.mxu0 0
    %355 = vmatpush1.bf16.msra.mxu0 0
    %356 = vmatprep.subr.bf16.mxu0 0
    %357 = vmatpush1.bf16.msra.mxu0 0
    %358 = vmatprep.subr.bf16.mxu0 0
    %359 = vmatpush1.bf16.msra.mxu0 0
    %360 = vmatprep.subr.bf16.mxu0 0
    %361 = vmatpush1.bf16.msra.mxu0 0
    %362 = vmatprep.subr.bf16.mxu0 0
    %363 = vmatpush1.bf16.msra.mxu0 0
    %364 = vmatprep.subr.bf16.mxu0 0
    %365 = vmatpush1.bf16.msra.mxu0 0
    %366 = vmatprep.subr.bf16.mxu0 0
    %367 = vmatpush1.bf16.msra.mxu0 0
    %368 = vmatprep.subr.bf16.mxu0 0
    %369 = vmatpush1.bf16.msra.mxu0 0
    %370 = vmatprep.subr.bf16.mxu0 0
    %371 = vmatpush1.bf16.msra.mxu0 0
    %372 = vmatprep.subr.bf16.mxu0 0
    %373 = vmatpush1.bf16.msra.mxu0 0
    %374 = vmatprep.mubr.bf16.mxu0 0
    %375 = vmatmul.mubr.bf16.gmra.mrb[0].mxu0 %v337
    %v376 = vpop.f32.mrb[0].mxu0
    %v377 = vadd.f32 0.0, %v376
    %v378 = vpop.f32.mrb[0].mxu0
    %v379 = vpop.f32.mrb[0].mxu0
    %v380 = vpop.f32.mrb[0].mxu0
    %381 = vdwg.mxu0
    %v382 = vxor.u32 %v377, 2147483648
    %v383 = vmul.f32 %v382, 1.442695
    %v384 = vpow.pop %v383
    %v385 = vadd.f32 %v384, 1.0
    %v386 = vrcp.pop %v385
    %v387 = vmul.f32 1.0, %v386
    %v388 = vtanh.pop %v377
    %390 = vrot.lane.b32.xlu0 %v55, 32
    %v391 = vpop.permute.xlu0 %390
    %v393 = vmul.f32 %v387, %v391
    %395 = vrot.lane.b32.xlu0 %v388, 64
    %v396 = vpop.permute.xlu0 %395
    %v398 = vmul.f32 %v387, %v396
    %400 = vrot.lane.b32.xlu0 %v398, 32
    %v401 = vpop.permute.xlu0 %400
    %v403 = vadd.f32 %v393, %v401
    %v404 = vtanh.pop %v403
    %406 = vrot.lane.b32.xlu0 %v404, 64
    %v407 = vpop.permute.xlu0 %406
    %v409 = vmul.f32 %v387, %v407
    %v410 = vpack.c.bf16 %v409, %v409
    %s411 = scalar_lea.vmem %s4, 36
    %v412 = vld [vmem:[%s411] sm:$0xf]
    %v413 = vld [vmem:[%s411 + $0x4] sm:$0xf]
    %v414 = vld [vmem:[%s411 + $0x8] sm:$0xf]
    %v415 = vld [vmem:[%s411 + $0xc] sm:$0xf]
    %v416 = vld [vmem:[%s411 + $0x10] sm:$0xf]
    %v417 = vld [vmem:[%s411 + $0x14] sm:$0xf]
    %v418 = vld [vmem:[%s411 + $0x18] sm:$0xf]
    %v419 = vld [vmem:[%s411 + $0x1c] sm:$0xf]
    %v420 = vld [vmem:[%s411 + $0x20] sm:$0x1]
    %422 = vrot.lane.b32.xlu0 %v410, 32
    %v423 = vpop.permute.xlu0 %422
    %425 = vrot.lane.b32.xlu0 %v44, 32
    %v426 = vpop.permute.xlu0 %425
    %v429 = vsel %vm303, %v423, %v426
    %v430 = vsel %vm307, %v429, 1065369472
    %v440 = vunpack.c.l.b16 %v412
    %v441 = vunpack.c.l.b16 %v413
    %v442 = vunpack.c.l.b16 %v414
    %v443 = vunpack.c.l.b16 %v415
    %v444 = vunpack.c.l.b16 %v416
    %v445 = vunpack.c.l.b16 %v417
    %v446 = vunpack.c.l.b16 %v418
    %v447 = vunpack.c.l.b16 %v419
    %v448 = vunpack.c.l.b16 %v420
    %v449 = vpack.c.b16 %v441, %v440
    %v450 = vpack.c.b16 %v443, %v442
    %v451 = vpack.c.b16 %v445, %v444
    %v452 = vpack.c.b16 %v447, %v446
    %v453 = vpack.c.b16 %v448, %v448
    %v458 = vsel %vm336, %v430, 0
    %v461 = vand.u32 %v453, %v215
    %463 = vmatprep.subr.bf16.mxu0 0
    %464 = vmatpush1.bf16.msra.mxu0 %v449
    %465 = vmatprep.subr.bf16.mxu0 0
    %466 = vmatpush1.bf16.msra.mxu0 %v450
    %467 = vmatprep.subr.bf16.mxu0 0
    %468 = vmatpush1.bf16.msra.mxu0 %v451
    %469 = vmatprep.subr.bf16.mxu0 0
    %470 = vmatpush1.bf16.msra.mxu0 %v452
    %471 = vmatprep.subr.bf16.mxu0 0
    %472 = vmatpush1.bf16.msra.mxu0 %v461
    %473 = vmatprep.subr.bf16.mxu0 0
    %474 = vmatpush1.bf16.msra.mxu0 0
    %475 = vmatprep.subr.bf16.mxu0 0
    %476 = vmatpush1.bf16.msra.mxu0 0
    %477 = vmatprep.subr.bf16.mxu0 0
    %478 = vmatpush1.bf16.msra.mxu0 0
    %479 = vmatprep.subr.bf16.mxu0 0
    %480 = vmatpush1.bf16.msra.mxu0 0
    %481 = vmatprep.subr.bf16.mxu0 0
    %482 = vmatpush1.bf16.msra.mxu0 0
    %483 = vmatprep.subr.bf16.mxu0 0
    %484 = vmatpush1.bf16.msra.mxu0 0
    %485 = vmatprep.subr.bf16.mxu0 0
    %486 = vmatpush1.bf16.msra.mxu0 0
    %487 = vmatprep.subr.bf16.mxu0 0
    %488 = vmatpush1.bf16.msra.mxu0 0
    %489 = vmatprep.subr.bf16.mxu0 0
    %490 = vmatpush1.bf16.msra.mxu0 0
    %491 = vmatprep.subr.bf16.mxu0 0
    %492 = vmatpush1.bf16.msra.mxu0 0
    %493 = vmatprep.subr.bf16.mxu0 0
    %494 = vmatpush1.bf16.msra.mxu0 0
    %495 = vmatprep.mubr.bf16.mxu0 0
    %496 = vmatmul.mubr.bf16.gmra.mrb[0].mxu0 %v458
    %v497 = vpop.f32.mrb[0].mxu0
    %v498 = vadd.f32 0.0, %v497
    %v499 = vpop.f32.mrb[0].mxu0
    %v500 = vpop.f32.mrb[0].mxu0
    %v501 = vpop.f32.mrb[0].mxu0
    %502 = vdwg.mxu0
    %v503 = vxor.u32 %v498, 2147483648
    %v504 = vmul.f32 %v503, 1.442695
    %v505 = vpow.pop %v504
    %v506 = vadd.f32 %v505, 1.0
    %v507 = vrcp.pop %v506
    %v508 = vmul.f32 1.0, %v507
    %v509 = vtanh.pop %v498
    %511 = vrot.lane.b32.xlu0 %v56, 32
    %v512 = vpop.permute.xlu0 %511
    %v514 = vmul.f32 %v508, %v512
    %516 = vrot.lane.b32.xlu0 %v509, 64
    %v517 = vpop.permute.xlu0 %516
    %v519 = vmul.f32 %v508, %v517
    %521 = vrot.lane.b32.xlu0 %v519, 32
    %v522 = vpop.permute.xlu0 %521
    %v524 = vadd.f32 %v514, %v522
    %v525 = vtanh.pop %v524
    %527 = vrot.lane.b32.xlu0 %v525, 64
    %v528 = vpop.permute.xlu0 %527
    %v530 = vmul.f32 %v508, %v528
    %v531 = vpack.c.bf16 %v530, %v530
    %s532 = scalar_lea.vmem %s4, 72
    %v533 = vld [vmem:[%s532] sm:$0xf]
    %v534 = vld [vmem:[%s532 + $0x4] sm:$0xf]
    %v535 = vld [vmem:[%s532 + $0x8] sm:$0xf]
    %v536 = vld [vmem:[%s532 + $0xc] sm:$0xf]
    %v537 = vld [vmem:[%s532 + $0x10] sm:$0xf]
    %v538 = vld [vmem:[%s532 + $0x14] sm:$0xf]
    %v539 = vld [vmem:[%s532 + $0x18] sm:$0xf]
    %v540 = vld [vmem:[%s532 + $0x1c] sm:$0xf]
    %v541 = vld [vmem:[%s532 + $0x20] sm:$0x1]
    %543 = vrot.lane.b32.xlu0 %v531, 32
    %v544 = vpop.permute.xlu0 %543
    %546 = vrot.lane.b32.xlu0 %v45, 32
    %v547 = vpop.permute.xlu0 %546
    %v550 = vsel %vm303, %v544, %v547
    %v551 = vsel %vm307, %v550, 1065369472
    %v561 = vunpack.c.l.b16 %v533
    %v562 = vunpack.c.l.b16 %v534
    %v563 = vunpack.c.l.b16 %v535
    %v564 = vunpack.c.l.b16 %v536
    %v565 = vunpack.c.l.b16 %v537
    %v566 = vunpack.c.l.b16 %v538
    %v567 = vunpack.c.l.b16 %v539
    %v568 = vunpack.c.l.b16 %v540
    %v569 = vunpack.c.l.b16 %v541
    %v570 = vpack.c.b16 %v562, %v561
    %v571 = vpack.c.b16 %v564, %v563
    %v572 = vpack.c.b16 %v566, %v565
    %v573 = vpack.c.b16 %v568, %v567
    %v574 = vpack.c.b16 %v569, %v569
    %v579 = vsel %vm336, %v551, 0
    %v582 = vand.u32 %v574, %v215
    %584 = vmatprep.subr.bf16.mxu0 0
    %585 = vmatpush1.bf16.msra.mxu0 %v570
    %586 = vmatprep.subr.bf16.mxu0 0
    %587 = vmatpush1.bf16.msra.mxu0 %v571
    %588 = vmatprep.subr.bf16.mxu0 0
    %589 = vmatpush1.bf16.msra.mxu0 %v572
    %590 = vmatprep.subr.bf16.mxu0 0
    %591 = vmatpush1.bf16.msra.mxu0 %v573
    %592 = vmatprep.subr.bf16.mxu0 0
    %593 = vmatpush1.bf16.msra.mxu0 %v582
    %594 = vmatprep.subr.bf16.mxu0 0
    %595 = vmatpush1.bf16.msra.mxu0 0
    %596 = vmatprep.subr.bf16.mxu0 0
    %597 = vmatpush1.bf16.msra.mxu0 0
    %598 = vmatprep.subr.bf16.mxu0 0
    %599 = vmatpush1.bf16.msra.mxu0 0
    %600 = vmatprep.subr.bf16.mxu0 0
    %601 = vmatpush1.bf16.msra.mxu0 0
    %602 = vmatprep.subr.bf16.mxu0 0
    %603 = vmatpush1.bf16.msra.mxu0 0
    %604 = vmatprep.subr.bf16.mxu0 0
    %605 = vmatpush1.bf16.msra.mxu0 0
    %606 = vmatprep.subr.bf16.mxu0 0
    %607 = vmatpush1.bf16.msra.mxu0 0
    %608 = vmatprep.subr.bf16.mxu0 0
    %609 = vmatpush1.bf16.msra.mxu0 0
    %610 = vmatprep.subr.bf16.mxu0 0
    %611 = vmatpush1.bf16.msra.mxu0 0
    %612 = vmatprep.subr.bf16.mxu0 0
    %613 = vmatpush1.bf16.msra.mxu0 0
    %614 = vmatprep.subr.bf16.mxu0 0
    %615 = vmatpush1.bf16.msra.mxu0 0
    %616 = vmatprep.mubr.bf16.mxu0 0
    %617 = vmatmul.mubr.bf16.gmra.mrb[0].mxu0 %v579
    %v618 = vpop.f32.mrb[0].mxu0
    %v619 = vadd.f32 0.0, %v618
    %v620 = vpop.f32.mrb[0].mxu0
    %v621 = vpop.f32.mrb[0].mxu0
    %v622 = vpop.f32.mrb[0].mxu0
    %623 = vdwg.mxu0
    %v624 = vxor.u32 %v619, 2147483648
    %v625 = vmul.f32 %v624, 1.442695
    %v626 = vpow.pop %v625
    %v627 = vadd.f32 %v626, 1.0
    %v628 = vrcp.pop %v627
    %v629 = vmul.f32 1.0, %v628
    %v630 = vtanh.pop %v619
    %632 = vrot.lane.b32.xlu0 %v57, 32
    %v633 = vpop.permute.xlu0 %632
    %v635 = vmul.f32 %v629, %v633
    %637 = vrot.lane.b32.xlu0 %v630, 64
    %v638 = vpop.permute.xlu0 %637
    %v640 = vmul.f32 %v629, %v638
    %642 = vrot.lane.b32.xlu0 %v640, 32
    %v643 = vpop.permute.xlu0 %642
    %v645 = vadd.f32 %v635, %v643
    %v646 = vtanh.pop %v645
    %648 = vrot.lane.b32.xlu0 %v646, 64
    %v649 = vpop.permute.xlu0 %648
    %v651 = vmul.f32 %v629, %v649
    %v652 = vpack.c.bf16 %v651, %v651
    %s653 = scalar_lea.vmem %s4, 108
    %v654 = vld [vmem:[%s653] sm:$0xf]
    %v655 = vld [vmem:[%s653 + $0x4] sm:$0xf]
    %v656 = vld [vmem:[%s653 + $0x8] sm:$0xf]
    %v657 = vld [vmem:[%s653 + $0xc] sm:$0xf]
    %v658 = vld [vmem:[%s653 + $0x10] sm:$0xf]
    %v659 = vld [vmem:[%s653 + $0x14] sm:$0xf]
    %v660 = vld [vmem:[%s653 + $0x18] sm:$0xf]
    %v661 = vld [vmem:[%s653 + $0x1c] sm:$0xf]
    %v662 = vld [vmem:[%s653 + $0x20] sm:$0x1]
    %664 = vrot.lane.b32.xlu0 %v652, 32
    %v665 = vpop.permute.xlu0 %664
    %667 = vrot.lane.b32.xlu0 %v46, 32
    %v668 = vpop.permute.xlu0 %667
    %v671 = vsel %vm303, %v665, %v668
    %v672 = vsel %vm307, %v671, 1065369472
    %v682 = vunpack.c.l.b16 %v654
    %v683 = vunpack.c.l.b16 %v655
    %v684 = vunpack.c.l.b16 %v656
    %v685 = vunpack.c.l.b16 %v657
    %v686 = vunpack.c.l.b16 %v658
    %v687 = vunpack.c.l.b16 %v659
    %v688 = vunpack.c.l.b16 %v660
    %v689 = vunpack.c.l.b16 %v661
    %v690 = vunpack.c.l.b16 %v662
    %v691 = vpack.c.b16 %v683, %v682
    %v692 = vpack.c.b16 %v685, %v684
    %v693 = vpack.c.b16 %v687, %v686
    %v694 = vpack.c.b16 %v689, %v688
    %v695 = vpack.c.b16 %v690, %v690
    %v700 = vsel %vm336, %v672, 0
    %v703 = vand.u32 %v695, %v215
    %705 = vmatprep.subr.bf16.mxu0 0
    %706 = vmatpush1.bf16.msra.mxu0 %v691
    %707 = vmatprep.subr.bf16.mxu0 0
    %708 = vmatpush1.bf16.msra.mxu0 %v692
    %709 = vmatprep.subr.bf16.mxu0 0
    %710 = vmatpush1.bf16.msra.mxu0 %v693
    %711 = vmatprep.subr.bf16.mxu0 0
    %712 = vmatpush1.bf16.msra.mxu0 %v694
    %713 = vmatprep.subr.bf16.mxu0 0
    %714 = vmatpush1.bf16.msra.mxu0 %v703
    %715 = vmatprep.subr.bf16.mxu0 0
    %716 = vmatpush1.bf16.msra.mxu0 0
    %717 = vmatprep.subr.bf16.mxu0 0
    %718 = vmatpush1.bf16.msra.mxu0 0
    %719 = vmatprep.subr.bf16.mxu0 0
    %720 = vmatpush1.bf16.msra.mxu0 0
    %721 = vmatprep.subr.bf16.mxu0 0
    %722 = vmatpush1.bf16.msra.mxu0 0
    %723 = vmatprep.subr.bf16.mxu0 0
    %724 = vmatpush1.bf16.msra.mxu0 0
    %725 = vmatprep.subr.bf16.mxu0 0
    %726 = vmatpush1.bf16.msra.mxu0 0
    %727 = vmatprep.subr.bf16.mxu0 0
    %728 = vmatpush1.bf16.msra.mxu0 0
    %729 = vmatprep.subr.bf16.mxu0 0
    %730 = vmatpush1.bf16.msra.mxu0 0
    %731 = vmatprep.subr.bf16.mxu0 0
    %732 = vmatpush1.bf16.msra.mxu0 0
    %733 = vmatprep.subr.bf16.mxu0 0
    %734 = vmatpush1.bf16.msra.mxu0 0
    %735 = vmatprep.subr.bf16.mxu0 0
    %736 = vmatpush1.bf16.msra.mxu0 0
    %737 = vmatprep.mubr.bf16.mxu0 0
    %738 = vmatmul.mubr.bf16.gmra.mrb[0].mxu0 %v700
    %v739 = vpop.f32.mrb[0].mxu0
    %v740 = vadd.f32 0.0, %v739
    %v741 = vpop.f32.mrb[0].mxu0
    %v742 = vpop.f32.mrb[0].mxu0
    %v743 = vpop.f32.mrb[0].mxu0
    %744 = vdwg.mxu0
    %v745 = vxor.u32 %v740, 2147483648
    %v746 = vmul.f32 %v745, 1.442695
    %v747 = vpow.pop %v746
    %v748 = vadd.f32 %v747, 1.0
    %v749 = vrcp.pop %v748
    %v750 = vmul.f32 1.0, %v749
    %v751 = vtanh.pop %v740
    %753 = vrot.lane.b32.xlu0 %v58, 32
    %v754 = vpop.permute.xlu0 %753
    %v756 = vmul.f32 %v750, %v754
    %758 = vrot.lane.b32.xlu0 %v751, 64
    %v759 = vpop.permute.xlu0 %758
    %v761 = vmul.f32 %v750, %v759
    %763 = vrot.lane.b32.xlu0 %v761, 32
    %v764 = vpop.permute.xlu0 %763
    %v766 = vadd.f32 %v756, %v764
    %v767 = vtanh.pop %v766
    %769 = vrot.lane.b32.xlu0 %v767, 64
    %v770 = vpop.permute.xlu0 %769
    %v772 = vmul.f32 %v750, %v770
    %v773 = vpack.c.bf16 %v772, %v772
    %s774 = scalar_lea.vmem %s4, 144
    %v775 = vld [vmem:[%s774] sm:$0xf]
    %v776 = vld [vmem:[%s774 + $0x4] sm:$0xf]
    %v777 = vld [vmem:[%s774 + $0x8] sm:$0xf]
    %v778 = vld [vmem:[%s774 + $0xc] sm:$0xf]
    %v779 = vld [vmem:[%s774 + $0x10] sm:$0xf]
    %v780 = vld [vmem:[%s774 + $0x14] sm:$0xf]
    %v781 = vld [vmem:[%s774 + $0x18] sm:$0xf]
    %v782 = vld [vmem:[%s774 + $0x1c] sm:$0xf]
    %v783 = vld [vmem:[%s774 + $0x20] sm:$0x1]
    %785 = vrot.lane.b32.xlu0 %v773, 32
    %v786 = vpop.permute.xlu0 %785
    %788 = vrot.lane.b32.xlu0 %v47, 32
    %v789 = vpop.permute.xlu0 %788
    %v792 = vsel %vm303, %v786, %v789
    %v793 = vsel %vm307, %v792, 1065369472
    %v803 = vunpack.c.l.b16 %v775
    %v804 = vunpack.c.l.b16 %v776
    %v805 = vunpack.c.l.b16 %v777
    %v806 = vunpack.c.l.b16 %v778
    %v807 = vunpack.c.l.b16 %v779
    %v808 = vunpack.c.l.b16 %v780
    %v809 = vunpack.c.l.b16 %v781
    %v810 = vunpack.c.l.b16 %v782
    %v811 = vunpack.c.l.b16 %v783
    %v812 = vpack.c.b16 %v804, %v803
    %v813 = vpack.c.b16 %v806, %v805
    %v814 = vpack.c.b16 %v808, %v807
    %v815 = vpack.c.b16 %v810, %v809
    %v816 = vpack.c.b16 %v811, %v811
    %v821 = vsel %vm336, %v793, 0
    %v824 = vand.u32 %v816, %v215
    %826 = vmatprep.subr.bf16.mxu0 0
    %827 = vmatpush1.bf16.msra.mxu0 %v812
    %828 = vmatprep.subr.bf16.mxu0 0
    %829 = vmatpush1.bf16.msra.mxu0 %v813
    %830 = vmatprep.subr.bf16.mxu0 0
    %831 = vmatpush1.bf16.msra.mxu0 %v814
    %832 = vmatprep.subr.bf16.mxu0 0
    %833 = vmatpush1.bf16.msra.mxu0 %v815
    %834 = vmatprep.subr.bf16.mxu0 0
    %835 = vmatpush1.bf16.msra.mxu0 %v824
    %836 = vmatprep.subr.bf16.mxu0 0
    %837 = vmatpush1.bf16.msra.mxu0 0
    %838 = vmatprep.subr.bf16.mxu0 0
    %839 = vmatpush1.bf16.msra.mxu0 0
    %840 = vmatprep.subr.bf16.mxu0 0
    %841 = vmatpush1.bf16.msra.mxu0 0
    %842 = vmatprep.subr.bf16.mxu0 0
    %843 = vmatpush1.bf16.msra.mxu0 0
    %844 = vmatprep.subr.bf16.mxu0 0
    %845 = vmatpush1.bf16.msra.mxu0 0
    %846 = vmatprep.subr.bf16.mxu0 0
    %847 = vmatpush1.bf16.msra.mxu0 0
    %848 = vmatprep.subr.bf16.mxu0 0
    %849 = vmatpush1.bf16.msra.mxu0 0
    %850 = vmatprep.subr.bf16.mxu0 0
    %851 = vmatpush1.bf16.msra.mxu0 0
    %852 = vmatprep.subr.bf16.mxu0 0
    %853 = vmatpush1.bf16.msra.mxu0 0
    %854 = vmatprep.subr.bf16.mxu0 0
    %855 = vmatpush1.bf16.msra.mxu0 0
    %856 = vmatprep.subr.bf16.mxu0 0
    %857 = vmatpush1.bf16.msra.mxu0 0
    %858 = vmatprep.mubr.bf16.mxu0 0
    %859 = vmatmul.mubr.bf16.gmra.mrb[0].mxu0 %v821
    %v860 = vpop.f32.mrb[0].mxu0
    %v861 = vadd.f32 0.0, %v860
    %v862 = vpop.f32.mrb[0].mxu0
    %v863 = vpop.f32.mrb[0].mxu0
    %v864 = vpop.f32.mrb[0].mxu0
    %865 = vdwg.mxu0
    %v866 = vxor.u32 %v861, 2147483648
    %v867 = vmul.f32 %v866, 1.442695
    %v868 = vpow.pop %v867
    %v869 = vadd.f32 %v868, 1.0
    %v870 = vrcp.pop %v869
    %v871 = vmul.f32 1.0, %v870
    %v872 = vtanh.pop %v861
    %874 = vrot.lane.b32.xlu0 %v59, 32
    %v875 = vpop.permute.xlu0 %874
    %v877 = vmul.f32 %v871, %v875
    %879 = vrot.lane.b32.xlu0 %v872, 64
    %v880 = vpop.permute.xlu0 %879
    %v882 = vmul.f32 %v871, %v880
    %884 = vrot.lane.b32.xlu0 %v882, 32
    %v885 = vpop.permute.xlu0 %884
    %v887 = vadd.f32 %v877, %v885
    %v888 = vtanh.pop %v887
    %890 = vrot.lane.b32.xlu0 %v888, 64
    %v891 = vpop.permute.xlu0 %890
    %v893 = vmul.f32 %v871, %v891
    %v894 = vpack.c.bf16 %v893, %v893
    %s895 = scalar_lea.vmem %s4, 180
    %v896 = vld [vmem:[%s895] sm:$0xf]
    %v897 = vld [vmem:[%s895 + $0x4] sm:$0xf]
    %v898 = vld [vmem:[%s895 + $0x8] sm:$0xf]
    %v899 = vld [vmem:[%s895 + $0xc] sm:$0xf]
    %v900 = vld [vmem:[%s895 + $0x10] sm:$0xf]
    %v901 = vld [vmem:[%s895 + $0x14] sm:$0xf]
    %v902 = vld [vmem:[%s895 + $0x18] sm:$0xf]
    %v903 = vld [vmem:[%s895 + $0x1c] sm:$0xf]
    %v904 = vld [vmem:[%s895 + $0x20] sm:$0x1]
    %906 = vrot.lane.b32.xlu0 %v894, 32
    %v907 = vpop.permute.xlu0 %906
    %909 = vrot.lane.b32.xlu0 %v48, 32
    %v910 = vpop.permute.xlu0 %909
    %v913 = vsel %vm303, %v907, %v910
    %v914 = vsel %vm307, %v913, 1065369472
    %v924 = vunpack.c.l.b16 %v896
    %v925 = vunpack.c.l.b16 %v897
    %v926 = vunpack.c.l.b16 %v898
    %v927 = vunpack.c.l.b16 %v899
    %v928 = vunpack.c.l.b16 %v900
    %v929 = vunpack.c.l.b16 %v901
    %v930 = vunpack.c.l.b16 %v902
    %v931 = vunpack.c.l.b16 %v903
    %v932 = vunpack.c.l.b16 %v904
    %v933 = vpack.c.b16 %v925, %v924
    %v934 = vpack.c.b16 %v927, %v926
    %v935 = vpack.c.b16 %v929, %v928
    %v936 = vpack.c.b16 %v931, %v930
    %v937 = vpack.c.b16 %v932, %v932
    %v942 = vsel %vm336, %v914, 0
    %v945 = vand.u32 %v937, %v215
    %947 = vmatprep.subr.bf16.mxu0 0
    %948 = vmatpush1.bf16.msra.mxu0 %v933
    %949 = vmatprep.subr.bf16.mxu0 0
    %950 = vmatpush1.bf16.msra.mxu0 %v934
    %951 = vmatprep.subr.bf16.mxu0 0
    %952 = vmatpush1.bf16.msra.mxu0 %v935
    %953 = vmatprep.subr.bf16.mxu0 0
    %954 = vmatpush1.bf16.msra.mxu0 %v936
    %955 = vmatprep.subr.bf16.mxu0 0
    %956 = vmatpush1.bf16.msra.mxu0 %v945
    %957 = vmatprep.subr.bf16.mxu0 0
    %958 = vmatpush1.bf16.msra.mxu0 0
    %959 = vmatprep.subr.bf16.mxu0 0
    %960 = vmatpush1.bf16.msra.mxu0 0
    %961 = vmatprep.subr.bf16.mxu0 0
    %962 = vmatpush1.bf16.msra.mxu0 0
    %963 = vmatprep.subr.bf16.mxu0 0
    %964 = vmatpush1.bf16.msra.mxu0 0
    %965 = vmatprep.subr.bf16.mxu0 0
    %966 = vmatpush1.bf16.msra.mxu0 0
    %967 = vmatprep.subr.bf16.mxu0 0
    %968 = vmatpush1.bf16.msra.mxu0 0
    %969 = vmatprep.subr.bf16.mxu0 0
    %970 = vmatpush1.bf16.msra.mxu0 0
    %971 = vmatprep.subr.bf16.mxu0 0
    %972 = vmatpush1.bf16.msra.mxu0 0
    %973 = vmatprep.subr.bf16.mxu0 0
    %974 = vmatpush1.bf16.msra.mxu0 0
    %975 = vmatprep.subr.bf16.mxu0 0
    %976 = vmatpush1.bf16.msra.mxu0 0
    %977 = vmatprep.subr.bf16.mxu0 0
    %978 = vmatpush1.bf16.msra.mxu0 0
    %979 = vmatprep.mubr.bf16.mxu0 0
    %980 = vmatmul.mubr.bf16.gmra.mrb[0].mxu0 %v942
    %v981 = vpop.f32.mrb[0].mxu0
    %v982 = vadd.f32 0.0, %v981
    %v983 = vpop.f32.mrb[0].mxu0
    %v984 = vpop.f32.mrb[0].mxu0
    %v985 = vpop.f32.mrb[0].mxu0
    %986 = vdwg.mxu0
    %v987 = vxor.u32 %v982, 2147483648
    %v988 = vmul.f32 %v987, 1.442695
    %v989 = vpow.pop %v988
    %v990 = vadd.f32 %v989, 1.0
    %v991 = vrcp.pop %v990
    %v992 = vmul.f32 1.0, %v991
    %v993 = vtanh.pop %v982
    %995 = vrot.lane.b32.xlu0 %v60, 32
    %v996 = vpop.permute.xlu0 %995
    %v998 = vmul.f32 %v992, %v996
    %1000 = vrot.lane.b32.xlu0 %v993, 64
    %v1001 = vpop.permute.xlu0 %1000
    %v1003 = vmul.f32 %v992, %v1001
    %1005 = vrot.lane.b32.xlu0 %v1003, 32
    %v1006 = vpop.permute.xlu0 %1005
    %v1008 = vadd.f32 %v998, %v1006
    %v1009 = vtanh.pop %v1008
    %1011 = vrot.lane.b32.xlu0 %v1009, 64
    %v1012 = vpop.permute.xlu0 %1011
    %v1014 = vmul.f32 %v992, %v1012
    %v1015 = vpack.c.bf16 %v1014, %v1014
    %s1016 = scalar_lea.vmem %s4, 216
    %v1017 = vld [vmem:[%s1016] sm:$0xf]
    %v1018 = vld [vmem:[%s1016 + $0x4] sm:$0xf]
    %v1019 = vld [vmem:[%s1016 + $0x8] sm:$0xf]
    %v1020 = vld [vmem:[%s1016 + $0xc] sm:$0xf]
    %v1021 = vld [vmem:[%s1016 + $0x10] sm:$0xf]
    %v1022 = vld [vmem:[%s1016 + $0x14] sm:$0xf]
    %v1023 = vld [vmem:[%s1016 + $0x18] sm:$0xf]
    %v1024 = vld [vmem:[%s1016 + $0x1c] sm:$0xf]
    %v1025 = vld [vmem:[%s1016 + $0x20] sm:$0x1]
    %1027 = vrot.lane.b32.xlu0 %v1015, 32
    %v1028 = vpop.permute.xlu0 %1027
    %1030 = vrot.lane.b32.xlu0 %v49, 32
    %v1031 = vpop.permute.xlu0 %1030
    %v1034 = vsel %vm303, %v1028, %v1031
    %v1035 = vsel %vm307, %v1034, 1065369472
    %v1045 = vunpack.c.l.b16 %v1017
    %v1046 = vunpack.c.l.b16 %v1018
    %v1047 = vunpack.c.l.b16 %v1019
    %v1048 = vunpack.c.l.b16 %v1020
    %v1049 = vunpack.c.l.b16 %v1021
    %v1050 = vunpack.c.l.b16 %v1022
    %v1051 = vunpack.c.l.b16 %v1023
    %v1052 = vunpack.c.l.b16 %v1024
    %v1053 = vunpack.c.l.b16 %v1025
    %v1054 = vpack.c.b16 %v1046, %v1045
    %v1055 = vpack.c.b16 %v1048, %v1047
    %v1056 = vpack.c.b16 %v1050, %v1049
    %v1057 = vpack.c.b16 %v1052, %v1051
    %v1058 = vpack.c.b16 %v1053, %v1053
    %v1063 = vsel %vm336, %v1035, 0
    %v1066 = vand.u32 %v1058, %v215
    %1068 = vmatprep.subr.bf16.mxu0 0
    %1069 = vmatpush1.bf16.msra.mxu0 %v1054
    %1070 = vmatprep.subr.bf16.mxu0 0
    %1071 = vmatpush1.bf16.msra.mxu0 %v1055
    %1072 = vmatprep.subr.bf16.mxu0 0
    %1073 = vmatpush1.bf16.msra.mxu0 %v1056
    %1074 = vmatprep.subr.bf16.mxu0 0
    %1075 = vmatpush1.bf16.msra.mxu0 %v1057
    %1076 = vmatprep.subr.bf16.mxu0 0
    %1077 = vmatpush1.bf16.msra.mxu0 %v1066
    %1078 = vmatprep.subr.bf16.mxu0 0
    %1079 = vmatpush1.bf16.msra.mxu0 0
    %1080 = vmatprep.subr.bf16.mxu0 0
    %1081 = vmatpush1.bf16.msra.mxu0 0
    %1082 = vmatprep.subr.bf16.mxu0 0
    %1083 = vmatpush1.bf16.msra.mxu0 0
    %1084 = vmatprep.subr.bf16.mxu0 0
    %1085 = vmatpush1.bf16.msra.mxu0 0
    %1086 = vmatprep.subr.bf16.mxu0 0
    %1087 = vmatpush1.bf16.msra.mxu0 0
    %1088 = vmatprep.subr.bf16.mxu0 0
    %1089 = vmatpush1.bf16.msra.mxu0 0
    %1090 = vmatprep.subr.bf16.mxu0 0
    %1091 = vmatpush1.bf16.msra.mxu0 0
    %1092 = vmatprep.subr.bf16.mxu0 0
    %1093 = vmatpush1.bf16.msra.mxu0 0
    %1094 = vmatprep.subr.bf16.mxu0 0
    %1095 = vmatpush1.bf16.msra.mxu0 0
    %1096 = vmatprep.subr.bf16.mxu0 0
    %1097 = vmatpush1.bf16.msra.mxu0 0
    %1098 = vmatprep.subr.bf16.mxu0 0
    %1099 = vmatpush1.bf16.msra.mxu0 0
    %1100 = vmatprep.mubr.bf16.mxu0 0
    %1101 = vmatmul.mubr.bf16.gmra.mrb[0].mxu0 %v1063
    %v1102 = vpop.f32.mrb[0].mxu0
    %v1103 = vadd.f32 0.0, %v1102
    %v1104 = vpop.f32.mrb[0].mxu0
    %v1105 = vpop.f32.mrb[0].mxu0
    %v1106 = vpop.f32.mrb[0].mxu0
    %1107 = vdwg.mxu0
    %v1108 = vxor.u32 %v1103, 2147483648
    %v1109 = vmul.f32 %v1108, 1.442695
    %v1110 = vpow.pop %v1109
    %v1111 = vadd.f32 %v1110, 1.0
    %v1112 = vrcp.pop %v1111
    %v1113 = vmul.f32 1.0, %v1112
    %v1114 = vtanh.pop %v1103
    %1116 = vrot.lane.b32.xlu0 %v61, 32
    %v1117 = vpop.permute.xlu0 %1116
    %v1119 = vmul.f32 %v1113, %v1117
    %1121 = vrot.lane.b32.xlu0 %v1114, 64
    %v1122 = vpop.permute.xlu0 %1121
    %v1124 = vmul.f32 %v1113, %v1122
    %1126 = vrot.lane.b32.xlu0 %v1124, 32
    %v1127 = vpop.permute.xlu0 %1126
    %v1129 = vadd.f32 %v1119, %v1127
    %v1130 = vtanh.pop %v1129
    %1132 = vrot.lane.b32.xlu0 %v1130, 64
    %v1133 = vpop.permute.xlu0 %1132
    %v1135 = vmul.f32 %v1113, %v1133
    %v1136 = vpack.c.bf16 %v1135, %v1135
    %s1137 = scalar_lea.vmem %s4, 252
    %v1138 = vld [vmem:[%s1137] sm:$0xf]
    %v1139 = vld [vmem:[%s1137 + $0x4] sm:$0xf]
    %v1140 = vld [vmem:[%s1137 + $0x8] sm:$0xf]
    %v1141 = vld [vmem:[%s1137 + $0xc] sm:$0xf]
    %v1142 = vld [vmem:[%s1137 + $0x10] sm:$0xf]
    %v1143 = vld [vmem:[%s1137 + $0x14] sm:$0xf]
    %v1144 = vld [vmem:[%s1137 + $0x18] sm:$0xf]
    %v1145 = vld [vmem:[%s1137 + $0x1c] sm:$0xf]
    %v1146 = vld [vmem:[%s1137 + $0x20] sm:$0x1]
    %1148 = vrot.lane.b32.xlu0 %v1136, 32
    %v1149 = vpop.permute.xlu0 %1148
    %1151 = vrot.lane.b32.xlu0 %v50, 32
    %v1152 = vpop.permute.xlu0 %1151
    %v1155 = vsel %vm303, %v1149, %v1152
    %v1156 = vsel %vm307, %v1155, 1065369472
    %v1166 = vunpack.c.l.b16 %v1138
    %v1167 = vunpack.c.l.b16 %v1139
    %v1168 = vunpack.c.l.b16 %v1140
    %v1169 = vunpack.c.l.b16 %v1141
    %v1170 = vunpack.c.l.b16 %v1142
    %v1171 = vunpack.c.l.b16 %v1143
    %v1172 = vunpack.c.l.b16 %v1144
    %v1173 = vunpack.c.l.b16 %v1145
    %v1174 = vunpack.c.l.b16 %v1146
    %v1175 = vpack.c.b16 %v1167, %v1166
    %v1176 = vpack.c.b16 %v1169, %v1168
    %v1177 = vpack.c.b16 %v1171, %v1170
    %v1178 = vpack.c.b16 %v1173, %v1172
    %v1179 = vpack.c.b16 %v1174, %v1174
    %v1184 = vsel %vm336, %v1156, 0
    %v1187 = vand.u32 %v1179, %v215
    %1189 = vmatprep.subr.bf16.mxu0 0
    %1190 = vmatpush1.bf16.msra.mxu0 %v1175
    %1191 = vmatprep.subr.bf16.mxu0 0
    %1192 = vmatpush1.bf16.msra.mxu0 %v1176
    %1193 = vmatprep.subr.bf16.mxu0 0
    %1194 = vmatpush1.bf16.msra.mxu0 %v1177
    %1195 = vmatprep.subr.bf16.mxu0 0
    %1196 = vmatpush1.bf16.msra.mxu0 %v1178
    %1197 = vmatprep.subr.bf16.mxu0 0
    %1198 = vmatpush1.bf16.msra.mxu0 %v1187
    %1199 = vmatprep.subr.bf16.mxu0 0
    %1200 = vmatpush1.bf16.msra.mxu0 0
    %1201 = vmatprep.subr.bf16.mxu0 0
    %1202 = vmatpush1.bf16.msra.mxu0 0
    %1203 = vmatprep.subr.bf16.mxu0 0
    %1204 = vmatpush1.bf16.msra.mxu0 0
    %1205 = vmatprep.subr.bf16.mxu0 0
    %1206 = vmatpush1.bf16.msra.mxu0 0
    %1207 = vmatprep.subr.bf16.mxu0 0
    %1208 = vmatpush1.bf16.msra.mxu0 0
    %1209 = vmatprep.subr.bf16.mxu0 0
    %1210 = vmatpush1.bf16.msra.mxu0 0
    %1211 = vmatprep.subr.bf16.mxu0 0
    %1212 = vmatpush1.bf16.msra.mxu0 0
    %1213 = vmatprep.subr.bf16.mxu0 0
    %1214 = vmatpush1.bf16.msra.mxu0 0
    %1215 = vmatprep.subr.bf16.mxu0 0
    %1216 = vmatpush1.bf16.msra.mxu0 0
    %1217 = vmatprep.subr.bf16.mxu0 0
    %1218 = vmatpush1.bf16.msra.mxu0 0
    %1219 = vmatprep.subr.bf16.mxu0 0
    %1220 = vmatpush1.bf16.msra.mxu0 0
    %1221 = vmatprep.mubr.bf16.mxu0 0
    %1222 = vmatmul.mubr.bf16.gmra.mrb[0].mxu0 %v1184
    %v1223 = vpop.f32.mrb[0].mxu0
    %v1224 = vadd.f32 0.0, %v1223
    %v1225 = vpop.f32.mrb[0].mxu0
    %v1226 = vpop.f32.mrb[0].mxu0
    %v1227 = vpop.f32.mrb[0].mxu0
    %1228 = vdwg.mxu0
    %v1229 = vxor.u32 %v1224, 2147483648
    %v1230 = vmul.f32 %v1229, 1.442695
    %v1231 = vpow.pop %v1230
    %v1232 = vadd.f32 %v1231, 1.0
    %v1233 = vrcp.pop %v1232
    %v1234 = vmul.f32 1.0, %v1233
    %v1235 = vtanh.pop %v1224
    %1237 = vrot.lane.b32.xlu0 %v62, 32
    %v1238 = vpop.permute.xlu0 %1237
    %v1240 = vmul.f32 %v1234, %v1238
    %1242 = vrot.lane.b32.xlu0 %v1235, 64
    %v1243 = vpop.permute.xlu0 %1242
    %v1245 = vmul.f32 %v1234, %v1243
    %1247 = vrot.lane.b32.xlu0 %v1245, 32
    %v1248 = vpop.permute.xlu0 %1247
    %v1250 = vadd.f32 %v1240, %v1248
    %v1251 = vtanh.pop %v1250
    %1253 = vrot.lane.b32.xlu0 %v1251, 64
    %v1254 = vpop.permute.xlu0 %1253
    %v1256 = vmul.f32 %v1234, %v1254
    %v1257 = vpack.c.bf16 %v1256, %v1256
    %s1258 = scalar_lea.vmem %s4, 288
    %v1259 = vld [vmem:[%s1258] sm:$0xf]
    %v1260 = vld [vmem:[%s1258 + $0x4] sm:$0xf]
    %v1261 = vld [vmem:[%s1258 + $0x8] sm:$0xf]
    %v1262 = vld [vmem:[%s1258 + $0xc] sm:$0xf]
    %v1263 = vld [vmem:[%s1258 + $0x10] sm:$0xf]
    %v1264 = vld [vmem:[%s1258 + $0x14] sm:$0xf]
    %v1265 = vld [vmem:[%s1258 + $0x18] sm:$0xf]
    %v1266 = vld [vmem:[%s1258 + $0x1c] sm:$0xf]
    %v1267 = vld [vmem:[%s1258 + $0x20] sm:$0x1]
    %1269 = vrot.lane.b32.xlu0 %v1257, 32
    %v1270 = vpop.permute.xlu0 %1269
    %1272 = vrot.lane.b32.xlu0 %v51, 32
    %v1273 = vpop.permute.xlu0 %1272
    %v1276 = vsel %vm303, %v1270, %v1273
    %v1277 = vsel %vm307, %v1276, 1065369472
    %v1287 = vunpack.c.l.b16 %v1259
    %v1288 = vunpack.c.l.b16 %v1260
    %v1289 = vunpack.c.l.b16 %v1261
    %v1290 = vunpack.c.l.b16 %v1262
    %v1291 = vunpack.c.l.b16 %v1263
    %v1292 = vunpack.c.l.b16 %v1264
    %v1293 = vunpack.c.l.b16 %v1265
    %v1294 = vunpack.c.l.b16 %v1266
    %v1295 = vunpack.c.l.b16 %v1267
    %v1296 = vpack.c.b16 %v1288, %v1287
    %v1297 = vpack.c.b16 %v1290, %v1289
    %v1298 = vpack.c.b16 %v1292, %v1291
    %v1299 = vpack.c.b16 %v1294, %v1293
    %v1300 = vpack.c.b16 %v1295, %v1295
    %v1305 = vsel %vm336, %v1277, 0
    %v1308 = vand.u32 %v1300, %v215
    %1310 = vmatprep.subr.bf16.mxu0 0
    %1311 = vmatpush1.bf16.msra.mxu0 %v1296
    %1312 = vmatprep.subr.bf16.mxu0 0
    %1313 = vmatpush1.bf16.msra.mxu0 %v1297
    %1314 = vmatprep.subr.bf16.mxu0 0
    %1315 = vmatpush1.bf16.msra.mxu0 %v1298
    %1316 = vmatprep.subr.bf16.mxu0 0
    %1317 = vmatpush1.bf16.msra.mxu0 %v1299
    %1318 = vmatprep.subr.bf16.mxu0 0
    %1319 = vmatpush1.bf16.msra.mxu0 %v1308
    %1320 = vmatprep.subr.bf16.mxu0 0
    %1321 = vmatpush1.bf16.msra.mxu0 0
    %1322 = vmatprep.subr.bf16.mxu0 0
    %1323 = vmatpush1.bf16.msra.mxu0 0
    %1324 = vmatprep.subr.bf16.mxu0 0
    %1325 = vmatpush1.bf16.msra.mxu0 0
    %1326 = vmatprep.subr.bf16.mxu0 0
    %1327 = vmatpush1.bf16.msra.mxu0 0
    %1328 = vmatprep.subr.bf16.mxu0 0
    %1329 = vmatpush1.bf16.msra.mxu0 0
    %1330 = vmatprep.subr.bf16.mxu0 0
    %1331 = vmatpush1.bf16.msra.mxu0 0
    %1332 = vmatprep.subr.bf16.mxu0 0
    %1333 = vmatpush1.bf16.msra.mxu0 0
    %1334 = vmatprep.subr.bf16.mxu0 0
    %1335 = vmatpush1.bf16.msra.mxu0 0
    %1336 = vmatprep.subr.bf16.mxu0 0
    %1337 = vmatpush1.bf16.msra.mxu0 0
    %1338 = vmatprep.subr.bf16.mxu0 0
    %1339 = vmatpush1.bf16.msra.mxu0 0
    %1340 = vmatprep.subr.bf16.mxu0 0
    %1341 = vmatpush1.bf16.msra.mxu0 0
    %1342 = vmatprep.mubr.bf16.mxu0 0
    %1343 = vmatmul.mubr.bf16.gmra.mrb[0].mxu0 %v1305
    %v1344 = vpop.f32.mrb[0].mxu0
    %v1345 = vadd.f32 0.0, %v1344
    %v1346 = vpop.f32.mrb[0].mxu0
    %v1347 = vpop.f32.mrb[0].mxu0
    %v1348 = vpop.f32.mrb[0].mxu0
    %1349 = vdwg.mxu0
    %v1350 = vxor.u32 %v1345, 2147483648
    %v1351 = vmul.f32 %v1350, 1.442695
    %v1352 = vpow.pop %v1351
    %v1353 = vadd.f32 %v1352, 1.0
    %v1354 = vrcp.pop %v1353
    %v1355 = vmul.f32 1.0, %v1354
    %v1356 = vtanh.pop %v1345
    %1358 = vrot.lane.b32.xlu0 %v63, 32
    %v1359 = vpop.permute.xlu0 %1358
    %v1361 = vmul.f32 %v1355, %v1359
    %1363 = vrot.lane.b32.xlu0 %v1356, 64
    %v1364 = vpop.permute.xlu0 %1363
    %v1366 = vmul.f32 %v1355, %v1364
    %1368 = vrot.lane.b32.xlu0 %v1366, 32
    %v1369 = vpop.permute.xlu0 %1368
    %v1371 = vadd.f32 %v1361, %v1369
    %v1372 = vtanh.pop %v1371
    %1374 = vrot.lane.b32.xlu0 %v1372, 64
    %v1375 = vpop.permute.xlu0 %1374
    %v1377 = vmul.f32 %v1355, %v1375
    %v1378 = vpack.c.bf16 %v1377, %v1377
    %s1379 = scalar_lea.vmem %s4, 324
    %v1380 = vld [vmem:[%s1379] sm:$0xf]
    %v1381 = vld [vmem:[%s1379 + $0x4] sm:$0xf]
    %v1382 = vld [vmem:[%s1379 + $0x8] sm:$0xf]
    %v1383 = vld [vmem:[%s1379 + $0xc] sm:$0xf]
    %v1384 = vld [vmem:[%s1379 + $0x10] sm:$0xf]
    %v1385 = vld [vmem:[%s1379 + $0x14] sm:$0xf]
    %v1386 = vld [vmem:[%s1379 + $0x18] sm:$0xf]
    %v1387 = vld [vmem:[%s1379 + $0x1c] sm:$0xf]
    %v1388 = vld [vmem:[%s1379 + $0x20] sm:$0x1]
    %1390 = vrot.lane.b32.xlu0 %v1378, 32
    %v1391 = vpop.permute.xlu0 %1390
    %1393 = vrot.lane.b32.xlu0 %v52, 32
    %v1394 = vpop.permute.xlu0 %1393
    %v1397 = vsel %vm303, %v1391, %v1394
    %v1398 = vsel %vm307, %v1397, 1065369472
    %v1408 = vunpack.c.l.b16 %v1380
    %v1409 = vunpack.c.l.b16 %v1381
    %v1410 = vunpack.c.l.b16 %v1382
    %v1411 = vunpack.c.l.b16 %v1383
    %v1412 = vunpack.c.l.b16 %v1384
    %v1413 = vunpack.c.l.b16 %v1385
    %v1414 = vunpack.c.l.b16 %v1386
    %v1415 = vunpack.c.l.b16 %v1387
    %v1416 = vunpack.c.l.b16 %v1388
    %v1417 = vpack.c.b16 %v1409, %v1408
    %v1418 = vpack.c.b16 %v1411, %v1410
    %v1419 = vpack.c.b16 %v1413, %v1412
    %v1420 = vpack.c.b16 %v1415, %v1414
    %v1421 = vpack.c.b16 %v1416, %v1416
    %v1426 = vsel %vm336, %v1398, 0
    %v1429 = vand.u32 %v1421, %v215
    %1431 = vmatprep.subr.bf16.mxu0 0
    %1432 = vmatpush1.bf16.msra.mxu0 %v1417
    %1433 = vmatprep.subr.bf16.mxu0 0
    %1434 = vmatpush1.bf16.msra.mxu0 %v1418
    %1435 = vmatprep.subr.bf16.mxu0 0
    %1436 = vmatpush1.bf16.msra.mxu0 %v1419
    %1437 = vmatprep.subr.bf16.mxu0 0
    %1438 = vmatpush1.bf16.msra.mxu0 %v1420
    %1439 = vmatprep.subr.bf16.mxu0 0
    %1440 = vmatpush1.bf16.msra.mxu0 %v1429
    %1441 = vmatprep.subr.bf16.mxu0 0
    %1442 = vmatpush1.bf16.msra.mxu0 0
    %1443 = vmatprep.subr.bf16.mxu0 0
    %1444 = vmatpush1.bf16.msra.mxu0 0
    %1445 = vmatprep.subr.bf16.mxu0 0
    %1446 = vmatpush1.bf16.msra.mxu0 0
    %1447 = vmatprep.subr.bf16.mxu0 0
    %1448 = vmatpush1.bf16.msra.mxu0 0
    %1449 = vmatprep.subr.bf16.mxu0 0
    %1450 = vmatpush1.bf16.msra.mxu0 0
    %1451 = vmatprep.subr.bf16.mxu0 0
    %1452 = vmatpush1.bf16.msra.mxu0 0
    %1453 = vmatprep.subr.bf16.mxu0 0
    %1454 = vmatpush1.bf16.msra.mxu0 0
    %1455 = vmatprep.subr.bf16.mxu0 0
    %1456 = vmatpush1.bf16.msra.mxu0 0
    %1457 = vmatprep.subr.bf16.mxu0 0
    %1458 = vmatpush1.bf16.msra.mxu0 0
    %1459 = vmatprep.subr.bf16.mxu0 0
    %1460 = vmatpush1.bf16.msra.mxu0 0
    %1461 = vmatprep.subr.bf16.mxu0 0
    %1462 = vmatpush1.bf16.msra.mxu0 0
    %1463 = vmatprep.mubr.bf16.mxu0 0
    %1464 = vmatmul.mubr.bf16.gmra.mrb[0].mxu0 %v1426
    %v1465 = vpop.f32.mrb[0].mxu0
    %v1466 = vadd.f32 0.0, %v1465
    %v1467 = vpop.f32.mrb[0].mxu0
    %v1468 = vpop.f32.mrb[0].mxu0
    %v1469 = vpop.f32.mrb[0].mxu0
    %1470 = vdwg.mxu0
    %v1471 = vxor.u32 %v1466, 2147483648
    %v1472 = vmul.f32 %v1471, 1.442695
    %v1473 = vpow.pop %v1472
    %v1474 = vadd.f32 %v1473, 1.0
    %v1475 = vrcp.pop %v1474
    %v1476 = vmul.f32 1.0, %v1475
    %v1477 = vtanh.pop %v1466
    %1479 = vrot.lane.b32.xlu0 %v64, 32
    %v1480 = vpop.permute.xlu0 %1479
    %v1482 = vmul.f32 %v1476, %v1480
    %1484 = vrot.lane.b32.xlu0 %v1477, 64
    %v1485 = vpop.permute.xlu0 %1484
    %v1487 = vmul.f32 %v1476, %v1485
    %1489 = vrot.lane.b32.xlu0 %v1487, 32
    %v1490 = vpop.permute.xlu0 %1489
    %v1492 = vadd.f32 %v1482, %v1490
    %v1493 = vtanh.pop %v1492
    %1495 = vrot.lane.b32.xlu0 %v1493, 64
    %v1496 = vpop.permute.xlu0 %1495
    %v1498 = vmul.f32 %v1476, %v1496
    %v1499 = vpack.c.bf16 %v1498, %v1498
    %s1500 = scalar_lea.vmem %s4, 360
    %v1501 = vld [vmem:[%s1500] sm:$0xf]
    %v1502 = vld [vmem:[%s1500 + $0x4] sm:$0xf]
    %v1503 = vld [vmem:[%s1500 + $0x8] sm:$0xf]
    %v1504 = vld [vmem:[%s1500 + $0xc] sm:$0xf]
    %v1505 = vld [vmem:[%s1500 + $0x10] sm:$0xf]
    %v1506 = vld [vmem:[%s1500 + $0x14] sm:$0xf]
    %v1507 = vld [vmem:[%s1500 + $0x18] sm:$0xf]
    %v1508 = vld [vmem:[%s1500 + $0x1c] sm:$0xf]
    %v1509 = vld [vmem:[%s1500 + $0x20] sm:$0x1]
    %1511 = vrot.lane.b32.xlu0 %v1499, 32
    %v1512 = vpop.permute.xlu0 %1511
    %1514 = vrot.lane.b32.xlu0 %v53, 32
    %v1515 = vpop.permute.xlu0 %1514
    %v1518 = vsel %vm303, %v1512, %v1515
    %v1519 = vsel %vm307, %v1518, 1065369472
    %v1529 = vunpack.c.l.b16 %v1501
    %v1530 = vunpack.c.l.b16 %v1502
    %v1531 = vunpack.c.l.b16 %v1503
    %v1532 = vunpack.c.l.b16 %v1504
    %v1533 = vunpack.c.l.b16 %v1505
    %v1534 = vunpack.c.l.b16 %v1506
    %v1535 = vunpack.c.l.b16 %v1507
    %v1536 = vunpack.c.l.b16 %v1508
    %v1537 = vunpack.c.l.b16 %v1509
    %v1538 = vpack.c.b16 %v1530, %v1529
    %v1539 = vpack.c.b16 %v1532, %v1531
    %v1540 = vpack.c.b16 %v1534, %v1533
    %v1541 = vpack.c.b16 %v1536, %v1535
    %v1542 = vpack.c.b16 %v1537, %v1537
    %v1547 = vsel %vm336, %v1519, 0
    %v1550 = vand.u32 %v1542, %v215
    %1552 = vmatprep.subr.bf16.mxu0 0
    %1553 = vmatpush1.bf16.msra.mxu0 %v1538
    %1554 = vmatprep.subr.bf16.mxu0 0
    %1555 = vmatpush1.bf16.msra.mxu0 %v1539
    %1556 = vmatprep.subr.bf16.mxu0 0
    %1557 = vmatpush1.bf16.msra.mxu0 %v1540
    %1558 = vmatprep.subr.bf16.mxu0 0
    %1559 = vmatpush1.bf16.msra.mxu0 %v1541
    %1560 = vmatprep.subr.bf16.mxu0 0
    %1561 = vmatpush1.bf16.msra.mxu0 %v1550
    %1562 = vmatprep.subr.bf16.mxu0 0
    %1563 = vmatpush1.bf16.msra.mxu0 0
    %1564 = vmatprep.subr.bf16.mxu0 0
    %1565 = vmatpush1.bf16.msra.mxu0 0
    %1566 = vmatprep.subr.bf16.mxu0 0
    %1567 = vmatpush1.bf16.msra.mxu0 0
    %1568 = vmatprep.subr.bf16.mxu0 0
    %1569 = vmatpush1.bf16.msra.mxu0 0
    %1570 = vmatprep.subr.bf16.mxu0 0
    %1571 = vmatpush1.bf16.msra.mxu0 0
    %1572 = vmatprep.subr.bf16.mxu0 0
    %1573 = vmatpush1.bf16.msra.mxu0 0
    %1574 = vmatprep.subr.bf16.mxu0 0
    %1575 = vmatpush1.bf16.msra.mxu0 0
    %1576 = vmatprep.subr.bf16.mxu0 0
    %1577 = vmatpush1.bf16.msra.mxu0 0
    %1578 = vmatprep.subr.bf16.mxu0 0
    %1579 = vmatpush1.bf16.msra.mxu0 0
    %1580 = vmatprep.subr.bf16.mxu0 0
    %1581 = vmatpush1.bf16.msra.mxu0 0
    %1582 = vmatprep.subr.bf16.mxu0 0
    %1583 = vmatpush1.bf16.msra.mxu0 0
    %1584 = vmatprep.mubr.bf16.mxu0 0
    %1585 = vmatmul.mubr.bf16.gmra.mrb[0].mxu0 %v1547
    %v1586 = vpop.f32.mrb[0].mxu0
    %v1587 = vadd.f32 0.0, %v1586
    %v1588 = vpop.f32.mrb[0].mxu0
    %v1589 = vpop.f32.mrb[0].mxu0
    %v1590 = vpop.f32.mrb[0].mxu0
    %1591 = vdwg.mxu0
    %v1592 = vxor.u32 %v1587, 2147483648
    %v1593 = vmul.f32 %v1592, 1.442695
    %v1594 = vpow.pop %v1593
    %v1595 = vadd.f32 %v1594, 1.0
    %v1596 = vrcp.pop %v1595
    %v1597 = vmul.f32 1.0, %v1596
    %v1598 = vtanh.pop %v1587
    %1600 = vrot.lane.b32.xlu0 %v65, 32
    %v1601 = vpop.permute.xlu0 %1600
    %v1603 = vmul.f32 %v1597, %v1601
    %1605 = vrot.lane.b32.xlu0 %v1598, 64
    %v1606 = vpop.permute.xlu0 %1605
    %v1608 = vmul.f32 %v1597, %v1606
    %1610 = vrot.lane.b32.xlu0 %v1608, 32
    %v1611 = vpop.permute.xlu0 %1610
    %v1613 = vadd.f32 %v1603, %v1611
    %v1614 = vtanh.pop %v1613
    %1616 = vrot.lane.b32.xlu0 %v1614, 64
    %v1617 = vpop.permute.xlu0 %1616
    %v1619 = vmul.f32 %v1597, %v1617
    %v1620 = vpack.c.bf16 %v1619, %v1619
    %1622 = vrot.lane.b32.xlu0 %v1620, 32
    %v1623 = vpop.permute.xlu0 %1622
    %v1625 = vsel %vm303, %v1623, 1065369472
    %v1626 = vld [vmem:[%s5] sm:$0xf]
    %v1627 = vld [vmem:[%s5 + $0x4] sm:$0xf]
    %v1628 = vld [vmem:[%s5 + $0x8] sm:$0xf]
    %v1629 = vld [vmem:[%s5 + $0xc] sm:$0xf]
    %v1630 = vld [vmem:[%s5 + $0x10] sm:$0x1]
    %v1636 = vunpack.c.l.b16 %v1626
    %v1637 = vunpack.c.l.b16 %v1627
    %v1638 = vunpack.c.l.b16 %v1628
    %v1639 = vunpack.c.l.b16 %v1629
    %v1640 = vunpack.c.l.b16 %v1630
    %v1641 = vpack.c.b16 %v1637, %v1636
    %v1642 = vpack.c.b16 %v1639, %v1638
    %v1643 = vpack.c.b16 %v1640, %v1640
    %vm1646 = vcmask 269312
    %v1647 = vsel %vm1646, %v1625, 0
    %v1650 = vand.u32 %v1643, %v215
    %1652 = vmatprep.subr.bf16.mxu0 0
    %1653 = vmatpush1.bf16.msra.mxu0 %v1641
    %1654 = vmatprep.subr.bf16.mxu0 0
    %1655 = vmatpush1.bf16.msra.mxu0 %v1642
    %1656 = vmatprep.subr.bf16.mxu0 0
    %1657 = vmatpush1.bf16.msra.mxu0 %v1650
    %1658 = vmatprep.subr.bf16.mxu0 0
    %1659 = vmatpush1.bf16.msra.mxu0 0
    %1660 = vmatprep.subr.bf16.mxu0 0
    %1661 = vmatpush1.bf16.msra.mxu0 0
    %1662 = vmatprep.subr.bf16.mxu0 0
    %1663 = vmatpush1.bf16.msra.mxu0 0
    %1664 = vmatprep.subr.bf16.mxu0 0
    %1665 = vmatpush1.bf16.msra.mxu0 0
    %1666 = vmatprep.subr.bf16.mxu0 0
    %1667 = vmatpush1.bf16.msra.mxu0 0
    %1668 = vmatprep.subr.bf16.mxu0 0
    %1669 = vmatpush1.bf16.msra.mxu0 0
    %1670 = vmatprep.subr.bf16.mxu0 0
    %1671 = vmatpush1.bf16.msra.mxu0 0
    %1672 = vmatprep.subr.bf16.mxu0 0
    %1673 = vmatpush1.bf16.msra.mxu0 0
    %1674 = vmatprep.subr.bf16.mxu0 0
    %1675 = vmatpush1.bf16.msra.mxu0 0
    %1676 = vmatprep.subr.bf16.mxu0 0
    %1677 = vmatpush1.bf16.msra.mxu0 0
    %1678 = vmatprep.subr.bf16.mxu0 0
    %1679 = vmatpush1.bf16.msra.mxu0 0
    %1680 = vmatprep.subr.bf16.mxu0 0
    %1681 = vmatpush1.bf16.msra.mxu0 0
    %1682 = vmatprep.subr.bf16.mxu0 0
    %1683 = vmatpush1.bf16.msra.mxu0 0
    %1684 = vmatprep.mubr.bf16.mxu0 0
    %1685 = vmatmul.mubr.bf16.gmra.mrb[0].mxu0 %v1647
    %v1686 = vpop.f32.mrb[0].mxu0
    %v1687 = vadd.f32 0.0, %v1686
    %v1688 = vpop.f32.mrb[0].mxu0
    %v1689 = vpop.f32.mrb[0].mxu0
    %v1690 = vpop.f32.mrb[0].mxu0
    %1691 = vdwg.mxu0
    %p1692 = scmp.ge.s32.totalorder %s36, 2
    // Predicated region
    $region33: #{decoder_forward.1} parent=29 // pred_check
      %p1693 = pneg %p1692
    $region34: #{decoder_forward.1} parent=29 // pred_check_branch
      %1695 = sbr.rel (%p1693) target = $region36
    $region35: #{decoder_forward.1} parent=29 // pred_region
      %s1696 = scalar_lea.sflag [#allocation3], %s66
      %s1697 = smul.u32 8, 1
      %s1698 = smul.u32 %s1697, 1
      %s1699 = sshll.u32 %s1698, 4
      %1700 = dma.done %s1696, %s1699
    $region36: #{decoder_forward.1} parent=29 // pred_fallthru
      _
    %v1702 = vcombine.high %v1687, %v1687
    %v1704 = vunpack.c.l.s4 1966171168
    %v1705 = vunpack.c.0.s8 %v1704
    %v1706 = vlaneseq
    %v1707 = vshrl.u32 %v1706, 7
    %v1708 = vsub.s32 %v1705, %v1707
    %v1709 = vrot.slane %v1687, %v1708
    %v1711 = vunpack.c.l.s4 1966171168
    %v1712 = vunpack.c.0.s8 %v1711
    %v1713 = vlaneseq
    %v1714 = vshrl.u32 %v1713, 7
    %v1715 = vsub.s32 %v1712, %v1714
    %v1716 = vrot.slane %v1702, %v1715
    %v1717 = vcombine.high %v1709, %v1709
    %v1718 = vcombine.high %v1716, %v1716
    %v1720 = vunpack.c.l.s4 1966171168
    %v1721 = vunpack.c.0.s8 %v1720
    %v1722 = vlaneseq
    %v1723 = vshrl.u32 %v1722, 7
    %v1724 = vsub.s32 %v1721, %v1723
    %v1725 = vrot.slane %v1709, %v1724
    %v1727 = vunpack.c.l.s4 1966171168
    %v1728 = vunpack.c.0.s8 %v1727
    %v1729 = vlaneseq
    %v1730 = vshrl.u32 %v1729, 7
    %v1731 = vsub.s32 %v1728, %v1730
    %v1732 = vrot.slane %v1716, %v1731
    %v1734 = vunpack.c.l.s4 1966171168
    %v1735 = vunpack.c.0.s8 %v1734
    %v1736 = vlaneseq
    %v1737 = vshrl.u32 %v1736, 7
    %v1738 = vsub.s32 %v1735, %v1737
    %v1739 = vrot.slane %v1717, %v1738
    %v1741 = vunpack.c.l.s4 1966171168
    %v1742 = vunpack.c.0.s8 %v1741
    %v1743 = vlaneseq
    %v1744 = vshrl.u32 %v1743, 7
    %v1745 = vsub.s32 %v1742, %v1744
    %v1746 = vrot.slane %v1718, %v1745
    %v1747 = vcombine.high %v1725, %v1725
    %v1748 = vcombine.high %v1732, %v1732
    %v1749 = vcombine.high %v1739, %v1739
    %v1750 = vcombine.high %v1746, %v1746
    %s1759 = smul.u32 %s66, 8
    %s1760 = scalar_lea.vmem [#allocation2], %s1759
    %1761 = vst [vmem:[%s1760] sm:$0x1] %v1725
    %1762 = vst [vmem:[%s1760 + $0x1] sm:$0x1] %v1739
    %1763 = vst [vmem:[%s1760 + $0x2] sm:$0x1] %v1747
    %1764 = vst [vmem:[%s1760 + $0x3] sm:$0x1] %v1749
    %1765 = vst [vmem:[%s1760 + $0x4] sm:$0x1] %v1732
    %1766 = vst [vmem:[%s1760 + $0x5] sm:$0x1] %v1746
    %1767 = vst [vmem:[%s1760 + $0x6] sm:$0x1] %v1748
    %1768 = vst [vmem:[%s1760 + $0x7] sm:$0x1] %v1750
    %s1769 = smul.u32 %s25, 8
    %s1770 = sadd.s32 %s36, %s1769
    %s1771 = scalar_lea.vmem %s6, %s1770
    %s1772 = scalar_lea.sflag [#allocation3], %s66
    %p1774 = scmp.lt.u32.totalorder 1, 8
    %p1775 = pneg %p1774
    // Predicated region
    $region37: #{decoder_forward.1} parent=29 // pred_check
      _
    $region38: #{decoder_forward.1} parent=29 // pred_check_branch
      %1777 = sbr.rel (%p1774) target = $region40
    $region39: #{decoder_forward.1} parent=29 // pred_region
      %s1806 = sand.u32 1, 7
      %p1807 = scmp.eq.s32.totalorder %s1806, 0
      %p1808 = pneg %p1807
      // Predicated region
      $region52: #{decoder_forward.1} parent=39 // pred_check
        _
      $region53: #{decoder_forward.1} parent=39 // pred_check_branch
        %1810 = sbr.rel (%p1807) target = $region55
      $region54: #{decoder_forward.1} parent=39 // pred_region
        %s1811 = sand.u32 1, 7
        %s1812 = ssub.s32 1, %s1811
        %s1813 = scalar_lea.vmem %s1760, %s1812 [#allocation2]
        %s1814 = ssub.s32 1, %s1811
        %s1815 = scalar_lea.vmem %s1771, %s1814
        loop: start=0, step=1, limit=1
        $region56: #{decoder_forward.1} parent=54 // loop_pre_header
          _
        $region57: #{decoder_forward.1} parent=54 // loop_header
          %s1817 = sphi 0, %s1821
          %p1818 = scmp.ge.s32.totalorder %s1817, 1
          %s1822 = sphi %s1760, %s1760
          %s1823 = sphi %s1771, %s1771
        $region58: #{decoder_forward.1} parent=54 // loop_header_branch
          %1820 = sbr.rel (%p1818) target = $region62
        $region59: #{decoder_forward.1} parent=54 // loop_body
          _
        $region60: #{decoder_forward.1} parent=54 // loop_footer
          %s1821 = sadd.s32 1, %s1817
        $region61: #{decoder_forward.1} parent=54 // loop_footer_branch
          %1816 = sbr.rel target = $region57
        $region62: #{decoder_forward.1} parent=54 // loop_exit
          _
        %s1824 = sshllo.u32 0, %s1811
        loop: start=0, step=1, limit=1
        $region63: #{decoder_forward.1} parent=54 // loop_pre_header
          _
        $region64: #{decoder_forward.1} parent=54 // loop_header
          %s1826 = sphi 0, %s1830
          %p1827 = scmp.ge.s32.totalorder %s1826, 1
          %s1831 = sphi %s1813, %s1813
          %s1832 = sphi %s1815, %s1815
        $region65: #{decoder_forward.1} parent=54 // loop_header_branch
          %1829 = sbr.rel (%p1827) target = $region69
        $region66: #{decoder_forward.1} parent=54 // loop_body
          %v1833 = vld [vmem:[%s1831] sm:%s1824]
          %1834 = vst [vmem:[%s1832] sm:%s1824] %v1833
          %v1835 = vld [vmem:[%s1831 + $0x1] sm:%s1824]
          %1836 = vst [vmem:[%s1832 + $0x8] sm:%s1824] %v1835
          %v1837 = vld [vmem:[%s1831 + $0x2] sm:%s1824]
          %1838 = vst [vmem:[%s1832 + $0x10] sm:%s1824] %v1837
          %v1839 = vld [vmem:[%s1831 + $0x3] sm:%s1824]
          %1840 = vst [vmem:[%s1832 + $0x18] sm:%s1824] %v1839
          %v1841 = vld [vmem:[%s1831 + $0x4] sm:%s1824]
          %1842 = vst [vmem:[%s1832 + $0x20] sm:%s1824] %v1841
          %v1843 = vld [vmem:[%s1831 + $0x5] sm:%s1824]
          %1844 = vst [vmem:[%s1832 + $0x28] sm:%s1824] %v1843
          %v1845 = vld [vmem:[%s1831 + $0x6] sm:%s1824]
          %1846 = vst [vmem:[%s1832 + $0x30] sm:%s1824] %v1845
          %v1847 = vld [vmem:[%s1831 + $0x7] sm:%s1824]
          %1848 = vst [vmem:[%s1832 + $0x38] sm:%s1824] %v1847
        $region67: #{decoder_forward.1} parent=54 // loop_footer
          %s1830 = sadd.s32 1, %s1826
        $region68: #{decoder_forward.1} parent=54 // loop_footer_branch
          %1825 = sbr.rel target = $region64
        $region69: #{decoder_forward.1} parent=54 // loop_exit
          _
      $region55: #{decoder_forward.1} parent=39 // pred_fallthru
        _
    $region40: #{decoder_forward.1} parent=29 // pred_fallthru
      _
    // Predicated region
    $region41: #{decoder_forward.1} parent=29 // pred_check
      %p1778 = pneg %p1774
    $region42: #{decoder_forward.1} parent=29 // pred_check_branch
      %1780 = sbr.rel (%p1778) target = $region44
    $region43: #{decoder_forward.1} parent=29 // pred_region
      %s1781 = sshllo.u32 0, 1
      loop: start=0, step=1, limit=1
      $region45: #{decoder_forward.1} parent=43 // loop_pre_header
        _
      $region46: #{decoder_forward.1} parent=43 // loop_header
        %s1783 = sphi 0, %s1787
        %p1784 = scmp.ge.s32.totalorder %s1783, 1
        %s1788 = sphi %s1760, %s1760
        %s1789 = sphi %s1771, %s1771
      $region47: #{decoder_forward.1} parent=43 // loop_header_branch
        %1786 = sbr.rel (%p1784) target = $region51
      $region48: #{decoder_forward.1} parent=43 // loop_body
        %v1790 = vld [vmem:[%s1788] sm:%s1781]
        %1791 = vst [vmem:[%s1789] sm:%s1781] %v1790
        %v1792 = vld [vmem:[%s1788 + $0x1] sm:%s1781]
        %1793 = vst [vmem:[%s1789 + $0x8] sm:%s1781] %v1792
        %v1794 = vld [vmem:[%s1788 + $0x2] sm:%s1781]
        %1795 = vst [vmem:[%s1789 + $0x10] sm:%s1781] %v1794
        %v1796 = vld [vmem:[%s1788 + $0x3] sm:%s1781]
        %1797 = vst [vmem:[%s1789 + $0x18] sm:%s1781] %v1796
        %v1798 = vld [vmem:[%s1788 + $0x4] sm:%s1781]
        %1799 = vst [vmem:[%s1789 + $0x20] sm:%s1781] %v1798
        %v1800 = vld [vmem:[%s1788 + $0x5] sm:%s1781]
        %1801 = vst [vmem:[%s1789 + $0x28] sm:%s1781] %v1800
        %v1802 = vld [vmem:[%s1788 + $0x6] sm:%s1781]
        %1803 = vst [vmem:[%s1789 + $0x30] sm:%s1781] %v1802
        %v1804 = vld [vmem:[%s1788 + $0x7] sm:%s1781]
        %1805 = vst [vmem:[%s1789 + $0x38] sm:%s1781] %v1804
      $region49: #{decoder_forward.1} parent=43 // loop_footer
        %s1787 = sadd.s32 1, %s1783
      $region50: #{decoder_forward.1} parent=43 // loop_footer_branch
        %1782 = sbr.rel target = $region46
      $region51: #{decoder_forward.1} parent=43 // loop_exit
        _
    $region44: #{decoder_forward.1} parent=29 // pred_fallthru
      _
    // Predicated region
    $region70: #{decoder_forward.1} parent=29 // pred_check
      _
    $region71: #{decoder_forward.1} parent=29 // pred_check_branch
      %1851 = sbr.rel (0) target = $region73
    $region72: #{decoder_forward.1} parent=29 // pred_region
      %1852 = vsyncadd %s1772, 128
    $region73: #{decoder_forward.1} parent=29 // pred_fallthru
      _
    %1853 = vmax.xlane.f32.xlu0 %v1687
    %v1854 = vpop.xlane.xlu0 %1853
    %vm1855 = vcmp.eq.f32.partialorder %v1687, %v1854
    %v1856 = vsel %vm1855, %v27, 128
    %v1857 = vand.u32 %v1856, 65535
    %v1858 = vshra.s32 %v1856, 16
    %v1859 = vcvt.s32.f32 %v1857
    %v1860 = vcvt.s32.f32 %v1858
    %1861 = vmin.xlane.f32.xlu0 %v1860
    %v1862 = vpop.xlane.xlu0 %1861
    %vm1863 = vcmp.eq.f32.partialorder %v1860, %v1862
    %v1864 = vsel %vm1863, %v1859, inf
    %1865 = vmin.xlane.f32.xlu0 %v1864
    %v1866 = vpop.xlane.xlu0 %1865
    %v1867 = vcvt.f32.s32 %v1866
    %v1868 = vcvt.f32.s32 %v1862
    %v1869 = vshll.u32 %v1868, 16
    %v1870 = vadd.s32 %v1869, %v1867
    %vm1871 = vcmp.eq.s32.totalorder %v27, %v1870
    %v1872 = vsel %vm1871, 1, 0
    %v1873 = vcvt.s32.f32 %v1872
    %v1874 = vpack.c.bf16 %v1873, %v1873
    %1888 = vrot.lane.b32.xlu0 %v280, 96
    %v1889 = vpop.permute.xlu0 %1888
    %1892 = vrot.lane.b32.xlu0 %v403, 96
    %v1893 = vpop.permute.xlu0 %1892
    %1896 = vrot.lane.b32.xlu0 %v524, 96
    %v1897 = vpop.permute.xlu0 %1896
    %1900 = vrot.lane.b32.xlu0 %v645, 96
    %v1901 = vpop.permute.xlu0 %1900
    %1904 = vrot.lane.b32.xlu0 %v766, 96
    %v1905 = vpop.permute.xlu0 %1904
    %1908 = vrot.lane.b32.xlu0 %v887, 96
    %v1909 = vpop.permute.xlu0 %1908
    %1912 = vrot.lane.b32.xlu0 %v1008, 96
    %v1913 = vpop.permute.xlu0 %1912
    %1916 = vrot.lane.b32.xlu0 %v1129, 96
    %v1917 = vpop.permute.xlu0 %1916
    %1920 = vrot.lane.b32.xlu0 %v1250, 96
    %v1921 = vpop.permute.xlu0 %1920
    %1924 = vrot.lane.b32.xlu0 %v1371, 96
    %v1925 = vpop.permute.xlu0 %1924
    %1928 = vrot.lane.b32.xlu0 %v1492, 96
    %v1929 = vpop.permute.xlu0 %1928
    %1932 = vrot.lane.b32.xlu0 %v1613, 96
    %v1933 = vpop.permute.xlu0 %1932
  $region30: #{decoder_forward.1} parent=0 // loop_footer
    %s40 = sadd.s32 1, %s36
  $region31: #{decoder_forward.1} parent=0 // loop_footer_branch
    %35 = sbr.rel target = $region27
  $region32: #{decoder_forward.1} parent=0 // loop_exit
    _
  %s1935 = smul.u32 8, 1
  %s1936 = smul.u32 %s1935, 1
  %s1937 = sshll.u32 %s1936, 4
  %1938 = dma.done [#allocation3], %s1937
  %s1939 = scalar_lea.sflag [#allocation3], 1
  %s1940 = sshll.u32 %s1936, 4
  %1941 = dma.done %s1939, %s1940
  %1942 = vsyncmov [#allocation3]
  %s1943 = vpop.sfrf %1942
  %p1944 = scmp.eq.s32.totalorder %s1943, 0
  %p1945 = pneg %p1944
  %1947 = shalt.err (%p1945)
  %s1948 = scalar_lea.sflag [#allocation3], 1
  %1949 = vsyncmov %s1948
  %s1950 = vpop.sfrf %1949
  %p1951 = scmp.eq.s32.totalorder %s1950, 0
  %p1952 = pneg %p1951
  %1954 = shalt.err (%p1952)

</llo_original>
